<compile_context>
chip_gen: v7x
topology: tpu7x:2x2x1
jax: 0.10.0
libtpu: 0.0.40
codegen_flags: <defaults>
</compile_context>

<pallas_src>
import functools

import jax
import jax.numpy as jnp
from jax.experimental import pallas as pl
from jax.experimental.pallas import tpu as pltpu

_OUT_W = 128                           # lane-dense output slab: [z | mu | log_var | zeros]
_MM_PREC = jax.lax.Precision.HIGHEST   # f32 parity with the PyTorch f32 module


# ---------------------------------------------------------------------------
# Parameter packing (done ONCE per parameter set, outside the per-call path)
# ---------------------------------------------------------------------------
def _round8(n):
    return ((n + 7) // 8) * 8


def _layout(d_in, hidden):
    """8-row-aligned row offsets of each fused tensor inside the packed slab."""
    h4, h2 = 4 * hidden, 2 * hidden
    cols = max(h4, _OUT_W)             # >= 128 lanes -> lane-dense params DMA
    r_w1 = 0
    r_b1 = _round8(d_in + 1)           # w1 carries one extra zero row (the eps lane)
    r_w2 = r_b1 + 8
    r_b2 = r_w2 + _round8(h4)
    r_w3 = r_b2 + 8
    r_b3 = r_w3 + _round8(h2)
    rows = r_b3 + 8
    return dict(w1=r_w1, b1=r_b1, w2=r_w2, b2=r_b2, w3=r_w3, b3=r_b3,
                rows=rows, cols=cols)


def _block_diag(a, b):
    ra, ca = a.shape
    rb, cb = b.shape
    top = jnp.concatenate([a, jnp.zeros((ra, cb), a.dtype)], axis=1)
    bot = jnp.concatenate([jnp.zeros((rb, ca), b.dtype), b], axis=1)
    return jnp.concatenate([top, bot], axis=0)


def pack_params(p, d_in, hidden):
    """Fuse the mu/log_var heads and pack everything into one f32 slab.

    Layer 1: heads concatenated along the output dim, plus one zero input row so the
             kernel can feed the [x | eps] input slab straight into the matmul.
    Layer 2: block-diagonal.
    Layer 3: padded to 128 output lanes so the final matmul directly emits the output
             slab (lane 1 = mu, lane 2 = log_var, all other lanes 0).
    """
    lay = _layout(d_in, hidden)
    h4, h2 = 4 * hidden, 2 * hidden

    w1 = jnp.concatenate([p["w1m"], p["w1v"]], axis=1)                    # (d_in, 4H)
    w1 = jnp.concatenate([w1, jnp.zeros((1, h4), jnp.float32)], axis=0)   # (d_in+1, 4H)
    b1 = jnp.concatenate([p["b1m"], p["b1v"]], axis=1)                    # (1, 4H)

    w2 = _block_diag(p["w2m"], p["w2v"])                                  # (4H, 2H)
    b2 = jnp.concatenate([p["b2m"], p["b2v"]], axis=1)                    # (1, 2H)

    w3 = jnp.zeros((h2, _OUT_W), jnp.float32)
    w3 = w3.at[0:hidden, 1].set(p["w3m"][:, 0])                           # lane 1 = mu
    w3 = w3.at[hidden:h2, 2].set(p["w3v"][:, 0])                          # lane 2 = log_var
    b3 = jnp.zeros((1, _OUT_W), jnp.float32)
    b3 = b3.at[0, 1].set(p["b3m"][0, 0])
    b3 = b3.at[0, 2].set(p["b3v"][0, 0])

    slab = jnp.zeros((lay["rows"], lay["cols"]), jnp.float32)
    for name, arr in (("w1", w1), ("b1", b1), ("w2", w2),
                      ("b2", b2), ("w3", w3), ("b3", b3)):
        r = lay[name]
        slab = slab.at[r:r + arr.shape[0], 0:arr.shape[1]].set(arr)
    return slab, lay


# ---------------------------------------------------------------------------
# Kernel
# ---------------------------------------------------------------------------
def _vi_kernel(xe_ref, p_ref, out_ref, *, d_in, hidden, lay):
    h4, h2 = 4 * hidden, 2 * hidden

    xe = xe_ref[...]                                  # (B, d_in+1) = [x | eps]
    eps = xe[:, d_in:d_in + 1]                        # (B, 1)
    params = p_ref[...]                               # packed slab, single VMEM load

    # Static, 8-row-aligned slices of the packed slab (no data movement).
    w1 = params[lay["w1"]:lay["w1"] + d_in + 1, 0:h4]
    b1 = params[lay["b1"]:lay["b1"] + 1, 0:h4]
    w2 = params[lay["w2"]:lay["w2"] + h4, 0:h2]
    b2 = params[lay["b2"]:lay["b2"] + 1, 0:h2]
    w3 = params[lay["w3"]:lay["w3"] + h2, 0:_OUT_W]
    b3 = params[lay["b3"]:lay["b3"] + 1, 0:_OUT_W]

    # Fused two-head MLP: 3 matmuls total (f32, MXU). The eps lane hits w1's zero row.
    h = jnp.maximum(jnp.dot(xe, w1, preferred_element_type=jnp.float32,
                            precision=_MM_PREC) + b1, 0.0)
    h = jnp.maximum(jnp.dot(h, w2, preferred_element_type=jnp.float32,
                            precision=_MM_PREC) + b2, 0.0)
    out3 = jnp.dot(h, w3, preferred_element_type=jnp.float32,
                   precision=_MM_PREC) + b3          # (B,128): lane1=mu, lane2=lv, rest 0

    mu = out3[:, 1:2]
    lv = out3[:, 2:3]
    sigma = jnp.exp(0.5 * lv) + 1e-5
    # TODO(synk): eps comes in with x (torch.randn_like equivalent generated outside);
    # pltpu.prng_seed + pltpu.stateful_normal could generate it in-kernel instead.
    z = mu + sigma * eps

    # out3 already has lane 0 (and lanes >=3) zeroed by construction: just drop z into lane 0.
    lane = jax.lax.broadcasted_iota(jnp.int32, (1, out_ref.shape[1]), 1)
    out_ref[...] = out3 + jnp.where(lane == 0, z, 0.0)


# ---------------------------------------------------------------------------
# Wrapper
# ---------------------------------------------------------------------------
def vi_base_forward(x, eps, slab, *, lay, d_in, hidden, block_b=1024):
    """Returns a (B, 3) array with columns [z, mu, log_var]."""
    B = x.shape[0]
    xe = jnp.concatenate([x, eps], axis=1)            # one tiny op; removes one input DMA

    kernel = functools.partial(_vi_kernel, d_in=d_in, hidden=hidden, lay=lay)
    h4, h2 = 4 * hidden, 2 * hidden
    ce = pl.CostEstimate(
        flops=2 * B * ((d_in + 1) * h4 + h4 * h2 + h2 * _OUT_W),
        transcendentals=B,
        bytes_accessed=4 * (B * (d_in + 1) + lay["rows"] * lay["cols"] + B * _OUT_W),
    )

    if B <= block_b:
        # Toy/small batch: no grid, whole arrays resident in VMEM (no pipeline scaffolding).
        vmem = pl.BlockSpec(memory_space=pltpu.MemorySpace.VMEM)
        out = pl.pallas_call(
            kernel,
            out_shape=jax.ShapeDtypeStruct((B, _OUT_W), jnp.float32),
            in_specs=[vmem, vmem],                    # [x|eps] slab + packed params
            out_specs=vmem,                           # single lane-dense output slab
            cost_estimate=ce,
        )(xe, slab)
        return out[:, 0:3]

    # Large batch: 1-D parallel grid over B keeps VMEM bounded (v7x: 64 MiB) and lets
    # multi-TC chips split the batch.
    bb = _round8(block_b)
    n_blk = pl.cdiv(B, bb)
    Bp = n_blk * bb
    if Bp != B:
        xe = jnp.pad(xe, ((0, Bp - B), (0, 0)))
    out = pl.pallas_call(
        kernel,
        out_shape=jax.ShapeDtypeStruct((Bp, _OUT_W), jnp.float32),
        grid=(n_blk,),
        in_specs=[pl.BlockSpec((bb, d_in + 1), lambda i: (i, 0)),
                  pl.BlockSpec((lay["rows"], lay["cols"]), lambda i: (0, 0))],
        out_specs=pl.BlockSpec((bb, _OUT_W), lambda i: (i, 0)),
        compiler_params=pltpu.CompilerParams(dimension_semantics=("parallel",)),
        cost_estimate=ce,
    )(xe, slab)
    return out[:B, 0:3]


# ---------------------------------------------------------------------------
# Init + pure-JAX reference (unfused, mirrors the PyTorch module)
# ---------------------------------------------------------------------------
def init_params(key, d_in, hidden):
    """Deterministic init mirroring nn.Linear shapes (stored as [in, out])."""
    dims = [(d_in, 2 * hidden), (2 * hidden, hidden), (hidden, 1)]
    params = {}
    for head in ("m", "v"):
        for li, (fi, fo) in enumerate(dims, start=1):
            key, kw, kb = jax.random.split(key, 3)
            bound = 1.0 / jnp.sqrt(jnp.float32(fi))
            params[f"w{li}{head}"] = jax.random.uniform(
                kw, (fi, fo), jnp.float32, -bound, bound)
            params[f"b{li}{head}"] = jax.random.uniform(
                kb, (1, fo), jnp.float32, -bound, bound)
    return params


def _ref_forward(x, eps, p):
    def mlp(h, w1, b1, w2, b2, w3, b3):
        h = jnp.maximum(h @ w1 + b1, 0.0)
        h = jnp.maximum(h @ w2 + b2, 0.0)
        return h @ w3 + b3
    mu = mlp(x, p["w1m"], p["b1m"], p["w2m"], p["b2m"], p["w3m"], p["b3m"])
    lv = mlp(x, p["w1v"], p["b1v"], p["w2v"], p["b2v"], p["w3v"], p["b3v"])
    sigma = jnp.exp(0.5 * lv) + 1e-5
    return mu + sigma * eps, mu, lv


if __name__ == "__main__":
    B, D_IN, HIDDEN = 8, 4, 8   # Linear(4,16)->ReLU->Linear(16,8)->ReLU->Linear(8,1), two heads

    key = jax.random.PRNGKey(0)
    kx, keps, kp = jax.random.split(key, 3)

    x = jax.random.normal(kx, (B, D_IN), jnp.float32)
    eps = jax.random.normal(keps, (B, 1), jnp.float32)   # reparameterization noise
    params = init_params(kp, D_IN, HIDDEN)

    # Pack parameters ONCE per parameter set (outside the per-call path).
    slab, lay = pack_params(params, D_IN, HIDDEN)
    slab = jax.block_until_ready(slab)

    fwd = jax.jit(functools.partial(vi_base_forward, lay=lay, d_in=D_IN, hidden=HIDDEN))
    out = jax.block_until_ready(fwd(x, eps, slab))       # (B, 3) = [z | mu | log_var]
    z, mu, log_var = out[:, 0:1], out[:, 1:2], out[:, 2:3]

    z_ref, mu_ref, lv_ref = _ref_forward(x, eps, params)
    assert jnp.allclose(mu, mu_ref, atol=1e-5), "mu mismatch"
    assert jnp.allclose(log_var, lv_ref, atol=1e-5), "log_var mismatch"
    assert jnp.allclose(z, z_ref, atol=1e-5), "z mismatch"

    # Also exercise the batched / gridded path (used when B is large) on a tiny case.
    B2 = 32
    kx2, keps2 = jax.random.split(jax.random.PRNGKey(1))
    x2 = jax.random.normal(kx2, (B2, D_IN), jnp.float32)
    eps2 = jax.random.normal(keps2, (B2, 1), jnp.float32)
    fwd_grid = jax.jit(functools.partial(vi_base_forward, lay=lay, d_in=D_IN,
                                         hidden=HIDDEN, block_b=8))
    out2 = jax.block_until_ready(fwd_grid(x2, eps2, slab))
    z2_ref, mu2_ref, lv2_ref = _ref_forward(x2, eps2, params)
    assert jnp.allclose(out2[:, 1:2], mu2_ref, atol=1e-5), "grid mu mismatch"
    assert jnp.allclose(out2[:, 2:3], lv2_ref, atol=1e-5), "grid log_var mismatch"
    assert jnp.allclose(out2[:, 0:1], z2_ref, atol=1e-5), "grid z mismatch"

    print("KERNEL_OK")
</pallas_src>

<mosaic_0001>
module attributes {stable_mosaic.version = 11 : i64} {
  func.func @_vi_kernel(%arg0: memref<8x5xf32, #tpu.memory_space<vmem>>, %arg1: memref<80x128xf32, #tpu.memory_space<vmem>>, %arg2: memref<8x128xf32, #tpu.memory_space<vmem>>) attributes {dimension_semantics = [], scalar_prefetch = 0 : i64, scratch_operands = 0 : i64, tpu.core_type = #tpu.core_type<tc>} {
    %c0 = arith.constant 0 : index
    %c0_0 = arith.constant 0 : index
    %0 = vector.load %arg0[%c0, %c0_0] : memref<8x5xf32, #tpu.memory_space<vmem>>, vector<8x5xf32>
    %1 = vector.extract_strided_slice %0 {offsets = [0, 4], sizes = [8, 1], strides = [1, 1]} : vector<8x5xf32> to vector<8x1xf32>
    %c0_1 = arith.constant 0 : index
    %c0_2 = arith.constant 0 : index
    %2 = vector.load %arg1[%c0_1, %c0_2] : memref<80x128xf32, #tpu.memory_space<vmem>>, vector<80x128xf32>
    %3 = vector.extract_strided_slice %2 {offsets = [0, 0], sizes = [5, 32], strides = [1, 1]} : vector<80x128xf32> to vector<5x32xf32>
    %4 = vector.extract_strided_slice %2 {offsets = [8, 0], sizes = [1, 32], strides = [1, 1]} : vector<80x128xf32> to vector<1x32xf32>
    %5 = vector.extract_strided_slice %2 {offsets = [16, 0], sizes = [32, 16], strides = [1, 1]} : vector<80x128xf32> to vector<32x16xf32>
    %6 = vector.extract_strided_slice %2 {offsets = [48, 0], sizes = [1, 16], strides = [1, 1]} : vector<80x128xf32> to vector<1x16xf32>
    %7 = vector.extract_strided_slice %2 {offsets = [56, 0], sizes = [16, 128], strides = [1, 1]} : vector<80x128xf32> to vector<16x128xf32>
    %8 = vector.extract_strided_slice %2 {offsets = [72, 0], sizes = [1, 128], strides = [1, 1]} : vector<80x128xf32> to vector<1x128xf32>
    %cst = arith.constant dense<0.000000e+00> : vector<8x32xf32>
    %9 = tpu.matmul %0, %3, %cst {dimension_numbers = #tpu.dot_dimension_numbers<[1], [0], [0], [1], [0, 0, 1, 1], [], []>, precision = #tpu.contract_precision<fp32>} : vector<8x5xf32>, vector<5x32xf32>, vector<8x32xf32> -> vector<8x32xf32>
    %10 = vector.broadcast %4 : vector<1x32xf32> to vector<8x32xf32>
    %11 = arith.addf %9, %10 : vector<8x32xf32>
    %cst_3 = arith.constant 0.000000e+00 : f32
    %12 = vector.broadcast %cst_3 : f32 to vector<8x32xf32>
    %13 = arith.maximumf %11, %12 : vector<8x32xf32>
    %cst_4 = arith.constant dense<0.000000e+00> : vector<8x16xf32>
    %14 = tpu.matmul %13, %5, %cst_4 {dimension_numbers = #tpu.dot_dimension_numbers<[1], [0], [0], [1], [0, 0, 1, 1], [], []>, precision = #tpu.contract_precision<fp32>} : vector<8x32xf32>, vector<32x16xf32>, vector<8x16xf32> -> vector<8x16xf32>
    %15 = vector.broadcast %6 : vector<1x16xf32> to vector<8x16xf32>
    %16 = arith.addf %14, %15 : vector<8x16xf32>
    %cst_5 = arith.constant 0.000000e+00 : f32
    %17 = vector.broadcast %cst_5 : f32 to vector<8x16xf32>
    %18 = arith.maximumf %16, %17 : vector<8x16xf32>
    %cst_6 = arith.constant dense<0.000000e+00> : vector<8x128xf32>
    %19 = tpu.matmul %18, %7, %cst_6 {dimension_numbers = #tpu.dot_dimension_numbers<[1], [0], [0], [1], [0, 0, 1, 1], [], []>, precision = #tpu.contract_precision<fp32>} : vector<8x16xf32>, vector<16x128xf32>, vector<8x128xf32> -> vector<8x128xf32>
    %20 = vector.broadcast %8 : vector<1x128xf32> to vector<8x128xf32>
    %21 = arith.addf %19, %20 : vector<8x128xf32>
    %22 = vector.extract_strided_slice %21 {offsets = [0, 1], sizes = [8, 1], strides = [1, 1]} : vector<8x128xf32> to vector<8x1xf32>
    %23 = vector.extract_strided_slice %21 {offsets = [0, 2], sizes = [8, 1], strides = [1, 1]} : vector<8x128xf32> to vector<8x1xf32>
    %cst_7 = arith.constant 5.000000e-01 : f32
    %24 = vector.broadcast %cst_7 : f32 to vector<8x1xf32>
    %25 = arith.mulf %24, %23 : vector<8x1xf32>
    %26 = math.exp %25 : vector<8x1xf32>
    %cst_8 = arith.constant 9.99999974E-6 : f32
    %27 = vector.broadcast %cst_8 : f32 to vector<8x1xf32>
    %28 = arith.addf %26, %27 : vector<8x1xf32>
    %29 = arith.mulf %28, %1 : vector<8x1xf32>
    %30 = arith.addf %22, %29 : vector<8x1xf32>
    %31 = tpu.iota {dimensions = array<i32: 1>} : vector<1x128xi32>
    %c0_i32 = arith.constant 0 : i32
    %32 = vector.broadcast %c0_i32 : i32 to vector<1x128xi32>
    %33 = arith.cmpi eq, %31, %32 : vector<1x128xi32>
    %cst_9 = arith.constant 0.000000e+00 : f32
    %34 = vector.shape_cast %33 : vector<1x128xi1> to vector<1x128xi1>
    %35 = vector.broadcast %34 : vector<1x128xi1> to vector<8x128xi1>
    %36 = vector.shape_cast %30 : vector<8x1xf32> to vector<8x1xf32>
    %37 = vector.broadcast %36 : vector<8x1xf32> to vector<8x128xf32>
    %38 = vector.broadcast %cst_9 : f32 to vector<8x128xf32>
    %39 = arith.select %35, %37, %38 : vector<8x128xi1>, vector<8x128xf32>
    %40 = arith.addf %21, %39 : vector<8x128xf32>
    %c0_10 = arith.constant 0 : index
    %c0_11 = arith.constant 0 : index
    %41 = vector.load %arg2[%c0_10, %c0_11] : memref<8x128xf32, #tpu.memory_space<vmem>>, vector<8x128xf32>
    tpu.vector_store %arg2[%c0_10, %c0_11], %40 {strides = array<i32>} : memref<8x128xf32, #tpu.memory_space<vmem>>, vector<8x128xf32>,
    return
  }
}

</mosaic_0001>

<llo_original>
// kernel: vi_base_forward.1
$region0: #{vi_base_forward.1}
  #allocation0 [shape = 'u32[]', space=smem, size = 0x4, offset = 0x4, fixed_abs, tag = 'smem constant byte address 0x4 - core index']
  #allocation1 [shape = 'u32[144,128]{1,0:T(1,128)}', space=vmem, size = 0x12000, scoped, tag = 'internal scratch']
  %s0 = inlined_call_operand.vmem [shape: f32[8,5], index: 0, kind: input, shape index: {}]
  %s1 = inlined_call_operand.hbm [shape: f32[80,128], index: 1, kind: input, shape index: {}]
  %s2 = inlined_call_operand.vmem [shape: f32[8,128], index: 2, kind: output, shape index: {}]
  %s3 = sld [smem:[#allocation0]]
  $region22: #{vi_base_forward.1} parent=0
    _
  %s5 = ssub.s32 1, %s3
  %s6 = scalar_select 0, %s5, %s3
  $region1: #{vi_base_forward.1} parent=0
    #allocation2 [shape = 'u8[40960]{0}', space=vmem, size = 0xa000, scoped, tag = 'input window, operand 1, single buffered']
    #allocation3 [shape = 's32[1]{0}', space=sflag, size = 0x4, scoped, tag = 'scoped memory for vi_base_forward.1']
    %7 = vsyncpa [#allocation3], 0
    // Predicated region
    $region2: #{vi_base_forward.1} parent=1 // pred_check
      _
    $region3: #{vi_base_forward.1} parent=1 // pred_check_branch
      %9 = sbr.rel (0) target = $region5
    $region4: #{vi_base_forward.1} parent=1 // pred_region
      _
    $region5: #{vi_base_forward.1} parent=1 // pred_fallthru
      _
    // Predicated region
    $region6: #{vi_base_forward.1} parent=1 // pred_check
      _
    $region7: #{vi_base_forward.1} parent=1 // pred_check_branch
      %11 = sbr.rel (0) target = $region9
    $region8: #{vi_base_forward.1} parent=1 // pred_region
      %s13 = ssub.s32 1280, 1280
      %14 = vsyncadd [#allocation3], %s13
      %s15 = sshll.u32 [#allocation2], 4
      %s16 = int_to_ptr.vmem [resolvable:$true] %s15
      %21 = dma.hbm_to_vmem [thread:$0]  %s1, 1280, %s16, [#allocation3], 128, 128, 8
    $region9: #{vi_base_forward.1} parent=1 // pred_fallthru
      _
    // Predicated region
    $region10: #{vi_base_forward.1} parent=1 // pred_check
      _
    $region11: #{vi_base_forward.1} parent=1 // pred_check_branch
      %23 = sbr.rel (0) target = $region13
    $region12: #{vi_base_forward.1} parent=1 // pred_region
      %24 = dma.done [#allocation3], 1280
    $region13: #{vi_base_forward.1} parent=1 // pred_fallthru
      _
    %v25 = vld [vmem:[%s0] sm:$0xff]
    %v26 = vld [vmem:[#allocation2] sm:$0xff]
    %v27 = vld [vmem:[#allocation2 + $0x8] sm:$0xff]
    %v28 = vld [vmem:[#allocation2 + $0x10] sm:$0xff]
    %v29 = vld [vmem:[#allocation2 + $0x18] sm:$0xff]
    %v30 = vld [vmem:[#allocation2 + $0x20] sm:$0xff]
    %v31 = vld [vmem:[#allocation2 + $0x28] sm:$0xff]
    %v32 = vld [vmem:[#allocation2 + $0x30] sm:$0xff]
    %v33 = vld [vmem:[#allocation2 + $0x38] sm:$0xff]
    %v34 = vld [vmem:[#allocation2 + $0x40] sm:$0xff]
    %v35 = vld [vmem:[#allocation2 + $0x48] sm:$0xff]
    %v36 = vlaneseq
    %v37 = vshrl.u32 %v36, 7
    %v38 = vsub.s32 0, %v37
    %v39 = vrot.slane %v27, %v38
    %vm40 = vcmask 39936
    %v42 = vsel %vm40, %v25, 0
    %vm44 = vcmask 1044480
    %v46 = vsel %vm44, %v26, 0
    %48 = vmatprep.subr.mxu0 0.0
    %v49 = vand.u32 %v46, 4294901760
    %50 = vmatpush1.msra.mxu0 %v49
    %51 = vmatprep.subr.mxu0 0.0
    %52 = vmatpush1.msra.mxu0 0.0
    %53 = vmatprep.subr.mxu0 0.0
    %54 = vmatpush1.msra.mxu0 0.0
    %55 = vmatprep.subr.mxu0 0.0
    %56 = vmatpush1.msra.mxu0 0.0
    %57 = vmatprep.subr.mxu0 0.0
    %58 = vmatpush1.msra.mxu0 0.0
    %59 = vmatprep.subr.mxu0 0.0
    %60 = vmatpush1.msra.mxu0 0.0
    %61 = vmatprep.subr.mxu0 0.0
    %62 = vmatpush1.msra.mxu0 0.0
    %63 = vmatprep.subr.mxu0 0.0
    %64 = vmatpush1.msra.mxu0 0.0
    %65 = vmatprep.subr.mxu0 0.0
    %66 = vmatpush1.msra.mxu0 0.0
    %67 = vmatprep.subr.mxu0 0.0
    %68 = vmatpush1.msra.mxu0 0.0
    %69 = vmatprep.subr.mxu0 0.0
    %70 = vmatpush1.msra.mxu0 0.0
    %71 = vmatprep.subr.mxu0 0.0
    %72 = vmatpush1.msra.mxu0 0.0
    %73 = vmatprep.subr.mxu0 0.0
    %74 = vmatpush1.msra.mxu0 0.0
    %75 = vmatprep.subr.mxu0 0.0
    %76 = vmatpush1.msra.mxu0 0.0
    %77 = vmatprep.subr.mxu0 0.0
    %78 = vmatpush1.msra.mxu0 0.0
    %79 = vmatprep.subr.mxu0 0.0
    %80 = vmatpush1.msra.mxu0 0.0
    %81 = vmatprep.subr.mxu0 0.0
    %82 = vmatpush1.msra.mxu0 0.0
    %83 = vmatprep.subr.mxu0 0.0
    %84 = vmatpush1.msra.mxu0 0.0
    %85 = vmatprep.subr.mxu0 0.0
    %86 = vmatpush1.msra.mxu0 0.0
    %87 = vmatprep.subr.mxu0 0.0
    %88 = vmatpush1.msra.mxu0 0.0
    %89 = vmatprep.subr.mxu0 0.0
    %90 = vmatpush1.msra.mxu0 0.0
    %91 = vmatprep.subr.mxu0 0.0
    %92 = vmatpush1.msra.mxu0 0.0
    %93 = vmatprep.subr.mxu0 0.0
    %94 = vmatpush1.msra.mxu0 0.0
    %95 = vmatprep.subr.mxu0 0.0
    %96 = vmatpush1.msra.mxu0 0.0
    %97 = vmatprep.subr.mxu0 0.0
    %98 = vmatpush1.msra.mxu0 0.0
    %99 = vmatprep.subr.mxu0 0.0
    %100 = vmatpush1.msra.mxu0 0.0
    %101 = vmatprep.subr.mxu0 0.0
    %102 = vmatpush1.msra.mxu0 0.0
    %103 = vmatprep.subr.mxu0 0.0
    %104 = vmatpush1.msra.mxu0 0.0
    %105 = vmatprep.subr.mxu0 0.0
    %106 = vmatpush1.msra.mxu0 0.0
    %107 = vmatprep.subr.mxu0 0.0
    %108 = vmatpush1.msra.mxu0 0.0
    %109 = vmatprep.subr.mxu0 0.0
    %110 = vmatpush1.msra.mxu0 0.0
    %111 = vmatprep.subr.mxu0 0.0
    %112 = vmatpush1.msra.mxu0 0.0
    %113 = vmatprep.mubr.f32.mxu0 0.0
    %v114 = vand.u32 %v42, 4294901760
    %v115 = vsub.f32 %v42, %v114
    %v116 = vand.u32 %v115, 4294901760
    %v117 = vsub.f32 %v115, %v116
    %v118 = vand.u32 %v117, 4294901760
    %119 = vmatmul.mubr.f32.gmra.mrb[0].mxu0 %v118
    %v120 = vpop.f32.mrb[0].mxu0
    %v121 = vadd.f32 %v39, %v120
    %v122 = vpop.f32.mrb[0].mxu0
    %123 = vdwg.mxu0
    %124 = vmatprep.subr.mxu0 0.0
    %v125 = vand.u32 %v46, 4294901760
    %v126 = vsub.f32 %v46, %v125
    %v127 = vand.u32 %v126, 4294901760
    %v128 = vsub.f32 %v126, %v127
    %v129 = vand.u32 %v128, 4294901760
    %130 = vmatpush1.msra.mxu0 %v129
    %131 = vmatprep.subr.mxu0 0.0
    %132 = vmatpush1.msra.mxu0 0.0
    %133 = vmatprep.subr.mxu0 0.0
    %134 = vmatpush1.msra.mxu0 0.0
    %135 = vmatprep.subr.mxu0 0.0
    %136 = vmatpush1.msra.mxu0 0.0
    %137 = vmatprep.subr.mxu0 0.0
    %138 = vmatpush1.msra.mxu0 0.0
    %139 = vmatprep.subr.mxu0 0.0
    %140 = vmatpush1.msra.mxu0 0.0
    %141 = vmatprep.subr.mxu0 0.0
    %142 = vmatpush1.msra.mxu0 0.0
    %143 = vmatprep.subr.mxu0 0.0
    %144 = vmatpush1.msra.mxu0 0.0
    %145 = vmatprep.subr.mxu0 0.0
    %146 = vmatpush1.msra.mxu0 0.0
    %147 = vmatprep.subr.mxu0 0.0
    %148 = vmatpush1.msra.mxu0 0.0
    %149 = vmatprep.subr.mxu0 0.0
    %150 = vmatpush1.msra.mxu0 0.0
    %151 = vmatprep.subr.mxu0 0.0
    %152 = vmatpush1.msra.mxu0 0.0
    %153 = vmatprep.subr.mxu0 0.0
    %154 = vmatpush1.msra.mxu0 0.0
    %155 = vmatprep.subr.mxu0 0.0
    %156 = vmatpush1.msra.mxu0 0.0
    %157 = vmatprep.subr.mxu0 0.0
    %158 = vmatpush1.msra.mxu0 0.0
    %159 = vmatprep.subr.mxu0 0.0
    %160 = vmatpush1.msra.mxu0 0.0
    %161 = vmatprep.subr.mxu0 0.0
    %162 = vmatpush1.msra.mxu0 0.0
    %163 = vmatprep.subr.mxu0 0.0
    %164 = vmatpush1.msra.mxu0 0.0
    %165 = vmatprep.subr.mxu0 0.0
    %166 = vmatpush1.msra.mxu0 0.0
    %167 = vmatprep.subr.mxu0 0.0
    %168 = vmatpush1.msra.mxu0 0.0
    %169 = vmatprep.subr.mxu0 0.0
    %170 = vmatpush1.msra.mxu0 0.0
    %171 = vmatprep.subr.mxu0 0.0
    %172 = vmatpush1.msra.mxu0 0.0
    %173 = vmatprep.subr.mxu0 0.0
    %174 = vmatpush1.msra.mxu0 0.0
    %175 = vmatprep.subr.mxu0 0.0
    %176 = vmatpush1.msra.mxu0 0.0
    %177 = vmatprep.subr.mxu0 0.0
    %178 = vmatpush1.msra.mxu0 0.0
    %179 = vmatprep.subr.mxu0 0.0
    %180 = vmatpush1.msra.mxu0 0.0
    %181 = vmatprep.subr.mxu0 0.0
    %182 = vmatpush1.msra.mxu0 0.0
    %183 = vmatprep.subr.mxu0 0.0
    %184 = vmatpush1.msra.mxu0 0.0
    %185 = vmatprep.subr.mxu0 0.0
    %186 = vmatpush1.msra.mxu0 0.0
    %187 = vmatprep.subr.mxu0 0.0
    %188 = vmatpush1.msra.mxu0 0.0
    %189 = vmatprep.subr.mxu0 0.0
    %190 = vmatpush1.msra.mxu0 0.0
    %191 = vmatprep.subr.mxu0 0.0
    %192 = vmatpush1.msra.mxu0 0.0
    %193 = vmatprep.mubr.f32.mxu0 0.0
    %v194 = vand.u32 %v42, 4294901760
    %195 = vmatmul.mubr.f32.gmra.mrb[0].mxu0 %v194
    %v196 = vpop.f32.mrb[0].mxu0
    %v197 = vadd.f32 %v121, %v196
    %v198 = vpop.f32.mrb[0].mxu0
    %199 = vdwg.mxu0
    %200 = vmatprep.subr.mxu0 0.0
    %v201 = vand.u32 %v46, 4294901760
    %v202 = vsub.f32 %v46, %v201
    %203 = vmatpush1.msra.mxu0 %v202
    %204 = vmatprep.subr.mxu0 0.0
    %205 = vmatpush1.msra.mxu0 0.0
    %206 = vmatprep.subr.mxu0 0.0
    %207 = vmatpush1.msra.mxu0 0.0
    %208 = vmatprep.subr.mxu0 0.0
    %209 = vmatpush1.msra.mxu0 0.0
    %210 = vmatprep.subr.mxu0 0.0
    %211 = vmatpush1.msra.mxu0 0.0
    %212 = vmatprep.subr.mxu0 0.0
    %213 = vmatpush1.msra.mxu0 0.0
    %214 = vmatprep.subr.mxu0 0.0
    %215 = vmatpush1.msra.mxu0 0.0
    %216 = vmatprep.subr.mxu0 0.0
    %217 = vmatpush1.msra.mxu0 0.0
    %218 = vmatprep.subr.mxu0 0.0
    %219 = vmatpush1.msra.mxu0 0.0
    %220 = vmatprep.subr.mxu0 0.0
    %221 = vmatpush1.msra.mxu0 0.0
    %222 = vmatprep.subr.mxu0 0.0
    %223 = vmatpush1.msra.mxu0 0.0
    %224 = vmatprep.subr.mxu0 0.0
    %225 = vmatpush1.msra.mxu0 0.0
    %226 = vmatprep.subr.mxu0 0.0
    %227 = vmatpush1.msra.mxu0 0.0
    %228 = vmatprep.subr.mxu0 0.0
    %229 = vmatpush1.msra.mxu0 0.0
    %230 = vmatprep.subr.mxu0 0.0
    %231 = vmatpush1.msra.mxu0 0.0
    %232 = vmatprep.subr.mxu0 0.0
    %233 = vmatpush1.msra.mxu0 0.0
    %234 = vmatprep.subr.mxu0 0.0
    %235 = vmatpush1.msra.mxu0 0.0
    %236 = vmatprep.subr.mxu0 0.0
    %237 = vmatpush1.msra.mxu0 0.0
    %238 = vmatprep.subr.mxu0 0.0
    %239 = vmatpush1.msra.mxu0 0.0
    %240 = vmatprep.subr.mxu0 0.0
    %241 = vmatpush1.msra.mxu0 0.0
    %242 = vmatprep.subr.mxu0 0.0
    %243 = vmatpush1.msra.mxu0 0.0
    %244 = vmatprep.subr.mxu0 0.0
    %245 = vmatpush1.msra.mxu0 0.0
    %246 = vmatprep.subr.mxu0 0.0
    %247 = vmatpush1.msra.mxu0 0.0
    %248 = vmatprep.subr.mxu0 0.0
    %249 = vmatpush1.msra.mxu0 0.0
    %250 = vmatprep.subr.mxu0 0.0
    %251 = vmatpush1.msra.mxu0 0.0
    %252 = vmatprep.subr.mxu0 0.0
    %253 = vmatpush1.msra.mxu0 0.0
    %254 = vmatprep.subr.mxu0 0.0
    %255 = vmatpush1.msra.mxu0 0.0
    %256 = vmatprep.subr.mxu0 0.0
    %257 = vmatpush1.msra.mxu0 0.0
    %258 = vmatprep.subr.mxu0 0.0
    %259 = vmatpush1.msra.mxu0 0.0
    %260 = vmatprep.subr.mxu0 0.0
    %261 = vmatpush1.msra.mxu0 0.0
    %262 = vmatprep.subr.mxu0 0.0
    %263 = vmatpush1.msra.mxu0 0.0
    %264 = vmatprep.subr.mxu0 0.0
    %265 = vmatpush1.msra.mxu0 0.0
    %266 = vmatprep.mubr.f32.mxu0 0.0
    %v267 = vand.u32 %v42, 4294901760
    %v268 = vsub.f32 %v42, %v267
    %269 = vmatmul.mubr.f32.gmra.mrb[0].mxu0 %v268
    %v270 = vpop.f32.mrb[0].mxu0
    %v271 = vadd.f32 %v197, %v270
    %v272 = vpop.f32.mrb[0].mxu0
    %273 = vdwg.mxu0
    %274 = vmatprep.subr.mxu0 0.0
    %v275 = vand.u32 %v46, 4294901760
    %276 = vmatpush1.msra.mxu0 %v275
    %277 = vmatprep.subr.mxu0 0.0
    %278 = vmatpush1.msra.mxu0 0.0
    %279 = vmatprep.subr.mxu0 0.0
    %280 = vmatpush1.msra.mxu0 0.0
    %281 = vmatprep.subr.mxu0 0.0
    %282 = vmatpush1.msra.mxu0 0.0
    %283 = vmatprep.subr.mxu0 0.0
    %284 = vmatpush1.msra.mxu0 0.0
    %285 = vmatprep.subr.mxu0 0.0
    %286 = vmatpush1.msra.mxu0 0.0
    %287 = vmatprep.subr.mxu0 0.0
    %288 = vmatpush1.msra.mxu0 0.0
    %289 = vmatprep.subr.mxu0 0.0
    %290 = vmatpush1.msra.mxu0 0.0
    %291 = vmatprep.subr.mxu0 0.0
    %292 = vmatpush1.msra.mxu0 0.0
    %293 = vmatprep.subr.mxu0 0.0
    %294 = vmatpush1.msra.mxu0 0.0
    %295 = vmatprep.subr.mxu0 0.0
    %296 = vmatpush1.msra.mxu0 0.0
    %297 = vmatprep.subr.mxu0 0.0
    %298 = vmatpush1.msra.mxu0 0.0
    %299 = vmatprep.subr.mxu0 0.0
    %300 = vmatpush1.msra.mxu0 0.0
    %301 = vmatprep.subr.mxu0 0.0
    %302 = vmatpush1.msra.mxu0 0.0
    %303 = vmatprep.subr.mxu0 0.0
    %304 = vmatpush1.msra.mxu0 0.0
    %305 = vmatprep.subr.mxu0 0.0
    %306 = vmatpush1.msra.mxu0 0.0
    %307 = vmatprep.subr.mxu0 0.0
    %308 = vmatpush1.msra.mxu0 0.0
    %309 = vmatprep.subr.mxu0 0.0
    %310 = vmatpush1.msra.mxu0 0.0
    %311 = vmatprep.subr.mxu0 0.0
    %312 = vmatpush1.msra.mxu0 0.0
    %313 = vmatprep.subr.mxu0 0.0
    %314 = vmatpush1.msra.mxu0 0.0
    %315 = vmatprep.subr.mxu0 0.0
    %316 = vmatpush1.msra.mxu0 0.0
    %317 = vmatprep.subr.mxu0 0.0
    %318 = vmatpush1.msra.mxu0 0.0
    %319 = vmatprep.subr.mxu0 0.0
    %320 = vmatpush1.msra.mxu0 0.0
    %321 = vmatprep.subr.mxu0 0.0
    %322 = vmatpush1.msra.mxu0 0.0
    %323 = vmatprep.subr.mxu0 0.0
    %324 = vmatpush1.msra.mxu0 0.0
    %325 = vmatprep.subr.mxu0 0.0
    %326 = vmatpush1.msra.mxu0 0.0
    %327 = vmatprep.subr.mxu0 0.0
    %328 = vmatpush1.msra.mxu0 0.0
    %329 = vmatprep.subr.mxu0 0.0
    %330 = vmatpush1.msra.mxu0 0.0
    %331 = vmatprep.subr.mxu0 0.0
    %332 = vmatpush1.msra.mxu0 0.0
    %333 = vmatprep.subr.mxu0 0.0
    %334 = vmatpush1.msra.mxu0 0.0
    %335 = vmatprep.subr.mxu0 0.0
    %336 = vmatpush1.msra.mxu0 0.0
    %337 = vmatprep.subr.mxu0 0.0
    %338 = vmatpush1.msra.mxu0 0.0
    %339 = vmatprep.mubr.f32.mxu0 0.0
    %v340 = vand.u32 %v42, 4294901760
    %v341 = vsub.f32 %v42, %v340
    %v342 = vand.u32 %v341, 4294901760
    %343 = vmatmul.mubr.f32.gmra.mrb[0].mxu0 %v342
    %v344 = vpop.f32.mrb[0].mxu0
    %v345 = vadd.f32 %v271, %v344
    %v346 = vpop.f32.mrb[0].mxu0
    %347 = vdwg.mxu0
    %348 = vmatprep.subr.mxu0 0.0
    %v349 = vand.u32 %v46, 4294901760
    %v350 = vsub.f32 %v46, %v349
    %v351 = vand.u32 %v350, 4294901760
    %352 = vmatpush1.msra.mxu0 %v351
    %353 = vmatprep.subr.mxu0 0.0
    %354 = vmatpush1.msra.mxu0 0.0
    %355 = vmatprep.subr.mxu0 0.0
    %356 = vmatpush1.msra.mxu0 0.0
    %357 = vmatprep.subr.mxu0 0.0
    %358 = vmatpush1.msra.mxu0 0.0
    %359 = vmatprep.subr.mxu0 0.0
    %360 = vmatpush1.msra.mxu0 0.0
    %361 = vmatprep.subr.mxu0 0.0
    %362 = vmatpush1.msra.mxu0 0.0
    %363 = vmatprep.subr.mxu0 0.0
    %364 = vmatpush1.msra.mxu0 0.0
    %365 = vmatprep.subr.mxu0 0.0
    %366 = vmatpush1.msra.mxu0 0.0
    %367 = vmatprep.subr.mxu0 0.0
    %368 = vmatpush1.msra.mxu0 0.0
    %369 = vmatprep.subr.mxu0 0.0
    %370 = vmatpush1.msra.mxu0 0.0
    %371 = vmatprep.subr.mxu0 0.0
    %372 = vmatpush1.msra.mxu0 0.0
    %373 = vmatprep.subr.mxu0 0.0
    %374 = vmatpush1.msra.mxu0 0.0
    %375 = vmatprep.subr.mxu0 0.0
    %376 = vmatpush1.msra.mxu0 0.0
    %377 = vmatprep.subr.mxu0 0.0
    %378 = vmatpush1.msra.mxu0 0.0
    %379 = vmatprep.subr.mxu0 0.0
    %380 = vmatpush1.msra.mxu0 0.0
    %381 = vmatprep.subr.mxu0 0.0
    %382 = vmatpush1.msra.mxu0 0.0
    %383 = vmatprep.subr.mxu0 0.0
    %384 = vmatpush1.msra.mxu0 0.0
    %385 = vmatprep.subr.mxu0 0.0
    %386 = vmatpush1.msra.mxu0 0.0
    %387 = vmatprep.subr.mxu0 0.0
    %388 = vmatpush1.msra.mxu0 0.0
    %389 = vmatprep.subr.mxu0 0.0
    %390 = vmatpush1.msra.mxu0 0.0
    %391 = vmatprep.subr.mxu0 0.0
    %392 = vmatpush1.msra.mxu0 0.0
    %393 = vmatprep.subr.mxu0 0.0
    %394 = vmatpush1.msra.mxu0 0.0
    %395 = vmatprep.subr.mxu0 0.0
    %396 = vmatpush1.msra.mxu0 0.0
    %397 = vmatprep.subr.mxu0 0.0
    %398 = vmatpush1.msra.mxu0 0.0
    %399 = vmatprep.subr.mxu0 0.0
    %400 = vmatpush1.msra.mxu0 0.0
    %401 = vmatprep.subr.mxu0 0.0
    %402 = vmatpush1.msra.mxu0 0.0
    %403 = vmatprep.subr.mxu0 0.0
    %404 = vmatpush1.msra.mxu0 0.0
    %405 = vmatprep.subr.mxu0 0.0
    %406 = vmatpush1.msra.mxu0 0.0
    %407 = vmatprep.subr.mxu0 0.0
    %408 = vmatpush1.msra.mxu0 0.0
    %409 = vmatprep.subr.mxu0 0.0
    %410 = vmatpush1.msra.mxu0 0.0
    %411 = vmatprep.subr.mxu0 0.0
    %412 = vmatpush1.msra.mxu0 0.0
    %413 = vmatprep.subr.mxu0 0.0
    %414 = vmatpush1.msra.mxu0 0.0
    %415 = vmatprep.mubr.f32.mxu0 0.0
    %v416 = vand.u32 %v42, 4294901760
    %417 = vmatmul.mubr.f32.gmra.mrb[0].mxu0 %v416
    %v418 = vpop.f32.mrb[0].mxu0
    %v419 = vadd.f32 %v345, %v418
    %v420 = vpop.f32.mrb[0].mxu0
    %421 = vdwg.mxu0
    %422 = vmatprep.subr.mxu0 0.0
    %v423 = vand.u32 %v46, 4294901760
    %424 = vmatpush1.msra.mxu0 %v423
    %425 = vmatprep.subr.mxu0 0.0
    %426 = vmatpush1.msra.mxu0 0.0
    %427 = vmatprep.subr.mxu0 0.0
    %428 = vmatpush1.msra.mxu0 0.0
    %429 = vmatprep.subr.mxu0 0.0
    %430 = vmatpush1.msra.mxu0 0.0
    %431 = vmatprep.subr.mxu0 0.0
    %432 = vmatpush1.msra.mxu0 0.0
    %433 = vmatprep.subr.mxu0 0.0
    %434 = vmatpush1.msra.mxu0 0.0
    %435 = vmatprep.subr.mxu0 0.0
    %436 = vmatpush1.msra.mxu0 0.0
    %437 = vmatprep.subr.mxu0 0.0
    %438 = vmatpush1.msra.mxu0 0.0
    %439 = vmatprep.subr.mxu0 0.0
    %440 = vmatpush1.msra.mxu0 0.0
    %441 = vmatprep.subr.mxu0 0.0
    %442 = vmatpush1.msra.mxu0 0.0
    %443 = vmatprep.subr.mxu0 0.0
    %444 = vmatpush1.msra.mxu0 0.0
    %445 = vmatprep.subr.mxu0 0.0
    %446 = vmatpush1.msra.mxu0 0.0
    %447 = vmatprep.subr.mxu0 0.0
    %448 = vmatpush1.msra.mxu0 0.0
    %449 = vmatprep.subr.mxu0 0.0
    %450 = vmatpush1.msra.mxu0 0.0
    %451 = vmatprep.subr.mxu0 0.0
    %452 = vmatpush1.msra.mxu0 0.0
    %453 = vmatprep.subr.mxu0 0.0
    %454 = vmatpush1.msra.mxu0 0.0
    %455 = vmatprep.subr.mxu0 0.0
    %456 = vmatpush1.msra.mxu0 0.0
    %457 = vmatprep.subr.mxu0 0.0
    %458 = vmatpush1.msra.mxu0 0.0
    %459 = vmatprep.subr.mxu0 0.0
    %460 = vmatpush1.msra.mxu0 0.0
    %461 = vmatprep.subr.mxu0 0.0
    %462 = vmatpush1.msra.mxu0 0.0
    %463 = vmatprep.subr.mxu0 0.0
    %464 = vmatpush1.msra.mxu0 0.0
    %465 = vmatprep.subr.mxu0 0.0
    %466 = vmatpush1.msra.mxu0 0.0
    %467 = vmatprep.subr.mxu0 0.0
    %468 = vmatpush1.msra.mxu0 0.0
    %469 = vmatprep.subr.mxu0 0.0
    %470 = vmatpush1.msra.mxu0 0.0
    %471 = vmatprep.subr.mxu0 0.0
    %472 = vmatpush1.msra.mxu0 0.0
    %473 = vmatprep.subr.mxu0 0.0
    %474 = vmatpush1.msra.mxu0 0.0
    %475 = vmatprep.subr.mxu0 0.0
    %476 = vmatpush1.msra.mxu0 0.0
    %477 = vmatprep.subr.mxu0 0.0
    %478 = vmatpush1.msra.mxu0 0.0
    %479 = vmatprep.subr.mxu0 0.0
    %480 = vmatpush1.msra.mxu0 0.0
    %481 = vmatprep.subr.mxu0 0.0
    %482 = vmatpush1.msra.mxu0 0.0
    %483 = vmatprep.subr.mxu0 0.0
    %484 = vmatpush1.msra.mxu0 0.0
    %485 = vmatprep.subr.mxu0 0.0
    %486 = vmatpush1.msra.mxu0 0.0
    %487 = vmatprep.mubr.f32.mxu0 0.0
    %v488 = vand.u32 %v42, 4294901760
    %489 = vmatmul.mubr.f32.gmra.mrb[0].mxu0 %v488
    %v490 = vpop.f32.mrb[0].mxu0
    %v491 = vadd.f32 %v419, %v490
    %v492 = vpop.f32.mrb[0].mxu0
    %493 = vdwg.mxu0
    %v494 = vmax.f32 %v491, 0.0
    %v495 = vlaneseq
    %v496 = vshrl.u32 %v495, 7
    %v497 = vsub.s32 0, %v496
    %v498 = vrot.slane %v32, %v497
    %vm499 = vcmask 261120
    %v501 = vsel %vm499, %v494, 0
    %503 = vmatprep.subr.mxu0 0.0
    %v504 = vand.u32 %v28, 4294901760
    %505 = vmatpush1.msra.mxu0 %v504
    %506 = vmatprep.subr.mxu0 0.0
    %v507 = vand.u32 %v29, 4294901760
    %508 = vmatpush1.msra.mxu0 %v507
    %509 = vmatprep.subr.mxu0 0.0
    %v510 = vand.u32 %v30, 4294901760
    %511 = vmatpush1.msra.mxu0 %v510
    %512 = vmatprep.subr.mxu0 0.0
    %v513 = vand.u32 %v31, 4294901760
    %514 = vmatpush1.msra.mxu0 %v513
    %515 = vmatprep.subr.mxu0 0.0
    %516 = vmatpush1.msra.mxu0 0.0
    %517 = vmatprep.subr.mxu0 0.0
    %518 = vmatpush1.msra.mxu0 0.0
    %519 = vmatprep.subr.mxu0 0.0
    %520 = vmatpush1.msra.mxu0 0.0
    %521 = vmatprep.subr.mxu0 0.0
    %522 = vmatpush1.msra.mxu0 0.0
    %523 = vmatprep.subr.mxu0 0.0
    %524 = vmatpush1.msra.mxu0 0.0
    %525 = vmatprep.subr.mxu0 0.0
    %526 = vmatpush1.msra.mxu0 0.0
    %527 = vmatprep.subr.mxu0 0.0
    %528 = vmatpush1.msra.mxu0 0.0
    %529 = vmatprep.subr.mxu0 0.0
    %530 = vmatpush1.msra.mxu0 0.0
    %531 = vmatprep.subr.mxu0 0.0
    %532 = vmatpush1.msra.mxu0 0.0
    %533 = vmatprep.subr.mxu0 0.0
    %534 = vmatpush1.msra.mxu0 0.0
    %535 = vmatprep.subr.mxu0 0.0
    %536 = vmatpush1.msra.mxu0 0.0
    %537 = vmatprep.subr.mxu0 0.0
    %538 = vmatpush1.msra.mxu0 0.0
    %539 = vmatprep.subr.mxu0 0.0
    %540 = vmatpush1.msra.mxu0 0.0
    %541 = vmatprep.subr.mxu0 0.0
    %542 = vmatpush1.msra.mxu0 0.0
    %543 = vmatprep.subr.mxu0 0.0
    %544 = vmatpush1.msra.mxu0 0.0
    %545 = vmatprep.subr.mxu0 0.0
    %546 = vmatpush1.msra.mxu0 0.0
    %547 = vmatprep.subr.mxu0 0.0
    %548 = vmatpush1.msra.mxu0 0.0
    %549 = vmatprep.subr.mxu0 0.0
    %550 = vmatpush1.msra.mxu0 0.0
    %551 = vmatprep.subr.mxu0 0.0
    %552 = vmatpush1.msra.mxu0 0.0
    %553 = vmatprep.subr.mxu0 0.0
    %554 = vmatpush1.msra.mxu0 0.0
    %555 = vmatprep.subr.mxu0 0.0
    %556 = vmatpush1.msra.mxu0 0.0
    %557 = vmatprep.subr.mxu0 0.0
    %558 = vmatpush1.msra.mxu0 0.0
    %559 = vmatprep.subr.mxu0 0.0
    %560 = vmatpush1.msra.mxu0 0.0
    %561 = vmatprep.subr.mxu0 0.0
    %562 = vmatpush1.msra.mxu0 0.0
    %563 = vmatprep.subr.mxu0 0.0
    %564 = vmatpush1.msra.mxu0 0.0
    %565 = vmatprep.subr.mxu0 0.0
    %566 = vmatpush1.msra.mxu0 0.0
    %567 = vmatprep.subr.mxu0 0.0
    %568 = vmatpush1.msra.mxu0 0.0
    %569 = vmatprep.subr.mxu0 0.0
    %570 = vmatpush1.msra.mxu0 0.0
    %571 = vmatprep.mubr.f32.mxu0 0.0
    %v572 = vand.u32 %v501, 4294901760
    %v573 = vsub.f32 %v501, %v572
    %v574 = vand.u32 %v573, 4294901760
    %v575 = vsub.f32 %v573, %v574
    %v576 = vand.u32 %v575, 4294901760
    %577 = vmatmul.mubr.f32.gmra.mrb[0].mxu0 %v576
    %v578 = vpop.f32.mrb[0].mxu0
    %v579 = vadd.f32 %v498, %v578
    %v580 = vpop.f32.mrb[0].mxu0
    %581 = vdwg.mxu0
    %582 = vmatprep.subr.mxu0 0.0
    %v583 = vand.u32 %v28, 4294901760
    %v584 = vsub.f32 %v28, %v583
    %v585 = vand.u32 %v584, 4294901760
    %v586 = vsub.f32 %v584, %v585
    %v587 = vand.u32 %v586, 4294901760
    %588 = vmatpush1.msra.mxu0 %v587
    %589 = vmatprep.subr.mxu0 0.0
    %v590 = vand.u32 %v29, 4294901760
    %v591 = vsub.f32 %v29, %v590
    %v592 = vand.u32 %v591, 4294901760
    %v593 = vsub.f32 %v591, %v592
    %v594 = vand.u32 %v593, 4294901760
    %595 = vmatpush1.msra.mxu0 %v594
    %596 = vmatprep.subr.mxu0 0.0
    %v597 = vand.u32 %v30, 4294901760
    %v598 = vsub.f32 %v30, %v597
    %v599 = vand.u32 %v598, 4294901760
    %v600 = vsub.f32 %v598, %v599
    %v601 = vand.u32 %v600, 4294901760
    %602 = vmatpush1.msra.mxu0 %v601
    %603 = vmatprep.subr.mxu0 0.0
    %v604 = vand.u32 %v31, 4294901760
    %v605 = vsub.f32 %v31, %v604
    %v606 = vand.u32 %v605, 4294901760
    %v607 = vsub.f32 %v605, %v606
    %v608 = vand.u32 %v607, 4294901760
    %609 = vmatpush1.msra.mxu0 %v608
    %610 = vmatprep.subr.mxu0 0.0
    %611 = vmatpush1.msra.mxu0 0.0
    %612 = vmatprep.subr.mxu0 0.0
    %613 = vmatpush1.msra.mxu0 0.0
    %614 = vmatprep.subr.mxu0 0.0
    %615 = vmatpush1.msra.mxu0 0.0
    %616 = vmatprep.subr.mxu0 0.0
    %617 = vmatpush1.msra.mxu0 0.0
    %618 = vmatprep.subr.mxu0 0.0
    %619 = vmatpush1.msra.mxu0 0.0
    %620 = vmatprep.subr.mxu0 0.0
    %621 = vmatpush1.msra.mxu0 0.0
    %622 = vmatprep.subr.mxu0 0.0
    %623 = vmatpush1.msra.mxu0 0.0
    %624 = vmatprep.subr.mxu0 0.0
    %625 = vmatpush1.msra.mxu0 0.0
    %626 = vmatprep.subr.mxu0 0.0
    %627 = vmatpush1.msra.mxu0 0.0
    %628 = vmatprep.subr.mxu0 0.0
    %629 = vmatpush1.msra.mxu0 0.0
    %630 = vmatprep.subr.mxu0 0.0
    %631 = vmatpush1.msra.mxu0 0.0
    %632 = vmatprep.subr.mxu0 0.0
    %633 = vmatpush1.msra.mxu0 0.0
    %634 = vmatprep.subr.mxu0 0.0
    %635 = vmatpush1.msra.mxu0 0.0
    %636 = vmatprep.subr.mxu0 0.0
    %637 = vmatpush1.msra.mxu0 0.0
    %638 = vmatprep.subr.mxu0 0.0
    %639 = vmatpush1.msra.mxu0 0.0
    %640 = vmatprep.subr.mxu0 0.0
    %641 = vmatpush1.msra.mxu0 0.0
    %642 = vmatprep.subr.mxu0 0.0
    %643 = vmatpush1.msra.mxu0 0.0
    %644 = vmatprep.subr.mxu0 0.0
    %645 = vmatpush1.msra.mxu0 0.0
    %646 = vmatprep.subr.mxu0 0.0
    %647 = vmatpush1.msra.mxu0 0.0
    %648 = vmatprep.subr.mxu0 0.0
    %649 = vmatpush1.msra.mxu0 0.0
    %650 = vmatprep.subr.mxu0 0.0
    %651 = vmatpush1.msra.mxu0 0.0
    %652 = vmatprep.subr.mxu0 0.0
    %653 = vmatpush1.msra.mxu0 0.0
    %654 = vmatprep.subr.mxu0 0.0
    %655 = vmatpush1.msra.mxu0 0.0
    %656 = vmatprep.subr.mxu0 0.0
    %657 = vmatpush1.msra.mxu0 0.0
    %658 = vmatprep.subr.mxu0 0.0
    %659 = vmatpush1.msra.mxu0 0.0
    %660 = vmatprep.subr.mxu0 0.0
    %661 = vmatpush1.msra.mxu0 0.0
    %662 = vmatprep.subr.mxu0 0.0
    %663 = vmatpush1.msra.mxu0 0.0
    %664 = vmatprep.subr.mxu0 0.0
    %665 = vmatpush1.msra.mxu0 0.0
    %666 = vmatprep.mubr.f32.mxu0 0.0
    %v667 = vand.u32 %v501, 4294901760
    %668 = vmatmul.mubr.f32.gmra.mrb[0].mxu0 %v667
    %v669 = vpop.f32.mrb[0].mxu0
    %v670 = vadd.f32 %v579, %v669
    %v671 = vpop.f32.mrb[0].mxu0
    %672 = vdwg.mxu0
    %673 = vmatprep.subr.mxu0 0.0
    %v674 = vand.u32 %v28, 4294901760
    %v675 = vsub.f32 %v28, %v674
    %676 = vmatpush1.msra.mxu0 %v675
    %677 = vmatprep.subr.mxu0 0.0
    %v678 = vand.u32 %v29, 4294901760
    %v679 = vsub.f32 %v29, %v678
    %680 = vmatpush1.msra.mxu0 %v679
    %681 = vmatprep.subr.mxu0 0.0
    %v682 = vand.u32 %v30, 4294901760
    %v683 = vsub.f32 %v30, %v682
    %684 = vmatpush1.msra.mxu0 %v683
    %685 = vmatprep.subr.mxu0 0.0
    %v686 = vand.u32 %v31, 4294901760
    %v687 = vsub.f32 %v31, %v686
    %688 = vmatpush1.msra.mxu0 %v687
    %689 = vmatprep.subr.mxu0 0.0
    %690 = vmatpush1.msra.mxu0 0.0
    %691 = vmatprep.subr.mxu0 0.0
    %692 = vmatpush1.msra.mxu0 0.0
    %693 = vmatprep.subr.mxu0 0.0
    %694 = vmatpush1.msra.mxu0 0.0
    %695 = vmatprep.subr.mxu0 0.0
    %696 = vmatpush1.msra.mxu0 0.0
    %697 = vmatprep.subr.mxu0 0.0
    %698 = vmatpush1.msra.mxu0 0.0
    %699 = vmatprep.subr.mxu0 0.0
    %700 = vmatpush1.msra.mxu0 0.0
    %701 = vmatprep.subr.mxu0 0.0
    %702 = vmatpush1.msra.mxu0 0.0
    %703 = vmatprep.subr.mxu0 0.0
    %704 = vmatpush1.msra.mxu0 0.0
    %705 = vmatprep.subr.mxu0 0.0
    %706 = vmatpush1.msra.mxu0 0.0
    %707 = vmatprep.subr.mxu0 0.0
    %708 = vmatpush1.msra.mxu0 0.0
    %709 = vmatprep.subr.mxu0 0.0
    %710 = vmatpush1.msra.mxu0 0.0
    %711 = vmatprep.subr.mxu0 0.0
    %712 = vmatpush1.msra.mxu0 0.0
    %713 = vmatprep.subr.mxu0 0.0
    %714 = vmatpush1.msra.mxu0 0.0
    %715 = vmatprep.subr.mxu0 0.0
    %716 = vmatpush1.msra.mxu0 0.0
    %717 = vmatprep.subr.mxu0 0.0
    %718 = vmatpush1.msra.mxu0 0.0
    %719 = vmatprep.subr.mxu0 0.0
    %720 = vmatpush1.msra.mxu0 0.0
    %721 = vmatprep.subr.mxu0 0.0
    %722 = vmatpush1.msra.mxu0 0.0
    %723 = vmatprep.subr.mxu0 0.0
    %724 = vmatpush1.msra.mxu0 0.0
    %725 = vmatprep.subr.mxu0 0.0
    %726 = vmatpush1.msra.mxu0 0.0
    %727 = vmatprep.subr.mxu0 0.0
    %728 = vmatpush1.msra.mxu0 0.0
    %729 = vmatprep.subr.mxu0 0.0
    %730 = vmatpush1.msra.mxu0 0.0
    %731 = vmatprep.subr.mxu0 0.0
    %732 = vmatpush1.msra.mxu0 0.0
    %733 = vmatprep.subr.mxu0 0.0
    %734 = vmatpush1.msra.mxu0 0.0
    %735 = vmatprep.subr.mxu0 0.0
    %736 = vmatpush1.msra.mxu0 0.0
    %737 = vmatprep.subr.mxu0 0.0
    %738 = vmatpush1.msra.mxu0 0.0
    %739 = vmatprep.subr.mxu0 0.0
    %740 = vmatpush1.msra.mxu0 0.0
    %741 = vmatprep.subr.mxu0 0.0
    %742 = vmatpush1.msra.mxu0 0.0
    %743 = vmatprep.subr.mxu0 0.0
    %744 = vmatpush1.msra.mxu0 0.0
    %745 = vmatprep.mubr.f32.mxu0 0.0
    %v746 = vand.u32 %v501, 4294901760
    %v747 = vsub.f32 %v501, %v746
    %748 = vmatmul.mubr.f32.gmra.mrb[0].mxu0 %v747
    %v749 = vpop.f32.mrb[0].mxu0
    %v750 = vadd.f32 %v670, %v749
    %v751 = vpop.f32.mrb[0].mxu0
    %752 = vdwg.mxu0
    %753 = vmatprep.subr.mxu0 0.0
    %v754 = vand.u32 %v28, 4294901760
    %755 = vmatpush1.msra.mxu0 %v754
    %756 = vmatprep.subr.mxu0 0.0
    %v757 = vand.u32 %v29, 4294901760
    %758 = vmatpush1.msra.mxu0 %v757
    %759 = vmatprep.subr.mxu0 0.0
    %v760 = vand.u32 %v30, 4294901760
    %761 = vmatpush1.msra.mxu0 %v760
    %762 = vmatprep.subr.mxu0 0.0
    %v763 = vand.u32 %v31, 4294901760
    %764 = vmatpush1.msra.mxu0 %v763
    %765 = vmatprep.subr.mxu0 0.0
    %766 = vmatpush1.msra.mxu0 0.0
    %767 = vmatprep.subr.mxu0 0.0
    %768 = vmatpush1.msra.mxu0 0.0
    %769 = vmatprep.subr.mxu0 0.0
    %770 = vmatpush1.msra.mxu0 0.0
    %771 = vmatprep.subr.mxu0 0.0
    %772 = vmatpush1.msra.mxu0 0.0
    %773 = vmatprep.subr.mxu0 0.0
    %774 = vmatpush1.msra.mxu0 0.0
    %775 = vmatprep.subr.mxu0 0.0
    %776 = vmatpush1.msra.mxu0 0.0
    %777 = vmatprep.subr.mxu0 0.0
    %778 = vmatpush1.msra.mxu0 0.0
    %779 = vmatprep.subr.mxu0 0.0
    %780 = vmatpush1.msra.mxu0 0.0
    %781 = vmatprep.subr.mxu0 0.0
    %782 = vmatpush1.msra.mxu0 0.0
    %783 = vmatprep.subr.mxu0 0.0
    %784 = vmatpush1.msra.mxu0 0.0
    %785 = vmatprep.subr.mxu0 0.0
    %786 = vmatpush1.msra.mxu0 0.0
    %787 = vmatprep.subr.mxu0 0.0
    %788 = vmatpush1.msra.mxu0 0.0
    %789 = vmatprep.subr.mxu0 0.0
    %790 = vmatpush1.msra.mxu0 0.0
    %791 = vmatprep.subr.mxu0 0.0
    %792 = vmatpush1.msra.mxu0 0.0
    %793 = vmatprep.subr.mxu0 0.0
    %794 = vmatpush1.msra.mxu0 0.0
    %795 = vmatprep.subr.mxu0 0.0
    %796 = vmatpush1.msra.mxu0 0.0
    %797 = vmatprep.subr.mxu0 0.0
    %798 = vmatpush1.msra.mxu0 0.0
    %799 = vmatprep.subr.mxu0 0.0
    %800 = vmatpush1.msra.mxu0 0.0
    %801 = vmatprep.subr.mxu0 0.0
    %802 = vmatpush1.msra.mxu0 0.0
    %803 = vmatprep.subr.mxu0 0.0
    %804 = vmatpush1.msra.mxu0 0.0
    %805 = vmatprep.subr.mxu0 0.0
    %806 = vmatpush1.msra.mxu0 0.0
    %807 = vmatprep.subr.mxu0 0.0
    %808 = vmatpush1.msra.mxu0 0.0
    %809 = vmatprep.subr.mxu0 0.0
    %810 = vmatpush1.msra.mxu0 0.0
    %811 = vmatprep.subr.mxu0 0.0
    %812 = vmatpush1.msra.mxu0 0.0
    %813 = vmatprep.subr.mxu0 0.0
    %814 = vmatpush1.msra.mxu0 0.0
    %815 = vmatprep.subr.mxu0 0.0
    %816 = vmatpush1.msra.mxu0 0.0
    %817 = vmatprep.subr.mxu0 0.0
    %818 = vmatpush1.msra.mxu0 0.0
    %819 = vmatprep.subr.mxu0 0.0
    %820 = vmatpush1.msra.mxu0 0.0
    %821 = vmatprep.mubr.f32.mxu0 0.0
    %v822 = vand.u32 %v501, 4294901760
    %v823 = vsub.f32 %v501, %v822
    %v824 = vand.u32 %v823, 4294901760
    %825 = vmatmul.mubr.f32.gmra.mrb[0].mxu0 %v824
    %v826 = vpop.f32.mrb[0].mxu0
    %v827 = vadd.f32 %v750, %v826
    %v828 = vpop.f32.mrb[0].mxu0
    %829 = vdwg.mxu0
    %830 = vmatprep.subr.mxu0 0.0
    %v831 = vand.u32 %v28, 4294901760
    %v832 = vsub.f32 %v28, %v831
    %v833 = vand.u32 %v832, 4294901760
    %834 = vmatpush1.msra.mxu0 %v833
    %835 = vmatprep.subr.mxu0 0.0
    %v836 = vand.u32 %v29, 4294901760
    %v837 = vsub.f32 %v29, %v836
    %v838 = vand.u32 %v837, 4294901760
    %839 = vmatpush1.msra.mxu0 %v838
    %840 = vmatprep.subr.mxu0 0.0
    %v841 = vand.u32 %v30, 4294901760
    %v842 = vsub.f32 %v30, %v841
    %v843 = vand.u32 %v842, 4294901760
    %844 = vmatpush1.msra.mxu0 %v843
    %845 = vmatprep.subr.mxu0 0.0
    %v846 = vand.u32 %v31, 4294901760
    %v847 = vsub.f32 %v31, %v846
    %v848 = vand.u32 %v847, 4294901760
    %849 = vmatpush1.msra.mxu0 %v848
    %850 = vmatprep.subr.mxu0 0.0
    %851 = vmatpush1.msra.mxu0 0.0
    %852 = vmatprep.subr.mxu0 0.0
    %853 = vmatpush1.msra.mxu0 0.0
    %854 = vmatprep.subr.mxu0 0.0
    %855 = vmatpush1.msra.mxu0 0.0
    %856 = vmatprep.subr.mxu0 0.0
    %857 = vmatpush1.msra.mxu0 0.0
    %858 = vmatprep.subr.mxu0 0.0
    %859 = vmatpush1.msra.mxu0 0.0
    %860 = vmatprep.subr.mxu0 0.0
    %861 = vmatpush1.msra.mxu0 0.0
    %862 = vmatprep.subr.mxu0 0.0
    %863 = vmatpush1.msra.mxu0 0.0
    %864 = vmatprep.subr.mxu0 0.0
    %865 = vmatpush1.msra.mxu0 0.0
    %866 = vmatprep.subr.mxu0 0.0
    %867 = vmatpush1.msra.mxu0 0.0
    %868 = vmatprep.subr.mxu0 0.0
    %869 = vmatpush1.msra.mxu0 0.0
    %870 = vmatprep.subr.mxu0 0.0
    %871 = vmatpush1.msra.mxu0 0.0
    %872 = vmatprep.subr.mxu0 0.0
    %873 = vmatpush1.msra.mxu0 0.0
    %874 = vmatprep.subr.mxu0 0.0
    %875 = vmatpush1.msra.mxu0 0.0
    %876 = vmatprep.subr.mxu0 0.0
    %877 = vmatpush1.msra.mxu0 0.0
    %878 = vmatprep.subr.mxu0 0.0
    %879 = vmatpush1.msra.mxu0 0.0
    %880 = vmatprep.subr.mxu0 0.0
    %881 = vmatpush1.msra.mxu0 0.0
    %882 = vmatprep.subr.mxu0 0.0
    %883 = vmatpush1.msra.mxu0 0.0
    %884 = vmatprep.subr.mxu0 0.0
    %885 = vmatpush1.msra.mxu0 0.0
    %886 = vmatprep.subr.mxu0 0.0
    %887 = vmatpush1.msra.mxu0 0.0
    %888 = vmatprep.subr.mxu0 0.0
    %889 = vmatpush1.msra.mxu0 0.0
    %890 = vmatprep.subr.mxu0 0.0
    %891 = vmatpush1.msra.mxu0 0.0
    %892 = vmatprep.subr.mxu0 0.0
    %893 = vmatpush1.msra.mxu0 0.0
    %894 = vmatprep.subr.mxu0 0.0
    %895 = vmatpush1.msra.mxu0 0.0
    %896 = vmatprep.subr.mxu0 0.0
    %897 = vmatpush1.msra.mxu0 0.0
    %898 = vmatprep.subr.mxu0 0.0
    %899 = vmatpush1.msra.mxu0 0.0
    %900 = vmatprep.subr.mxu0 0.0
    %901 = vmatpush1.msra.mxu0 0.0
    %902 = vmatprep.subr.mxu0 0.0
    %903 = vmatpush1.msra.mxu0 0.0
    %904 = vmatprep.subr.mxu0 0.0
    %905 = vmatpush1.msra.mxu0 0.0
    %906 = vmatprep.mubr.f32.mxu0 0.0
    %v907 = vand.u32 %v501, 4294901760
    %908 = vmatmul.mubr.f32.gmra.mrb[0].mxu0 %v907
    %v909 = vpop.f32.mrb[0].mxu0
    %v910 = vadd.f32 %v827, %v909
    %v911 = vpop.f32.mrb[0].mxu0
    %912 = vdwg.mxu0
    %913 = vmatprep.subr.mxu0 0.0
    %v914 = vand.u32 %v28, 4294901760
    %915 = vmatpush1.msra.mxu0 %v914
    %916 = vmatprep.subr.mxu0 0.0
    %v917 = vand.u32 %v29, 4294901760
    %918 = vmatpush1.msra.mxu0 %v917
    %919 = vmatprep.subr.mxu0 0.0
    %v920 = vand.u32 %v30, 4294901760
    %921 = vmatpush1.msra.mxu0 %v920
    %922 = vmatprep.subr.mxu0 0.0
    %v923 = vand.u32 %v31, 4294901760
    %924 = vmatpush1.msra.mxu0 %v923
    %925 = vmatprep.subr.mxu0 0.0
    %926 = vmatpush1.msra.mxu0 0.0
    %927 = vmatprep.subr.mxu0 0.0
    %928 = vmatpush1.msra.mxu0 0.0
    %929 = vmatprep.subr.mxu0 0.0
    %930 = vmatpush1.msra.mxu0 0.0
    %931 = vmatprep.subr.mxu0 0.0
    %932 = vmatpush1.msra.mxu0 0.0
    %933 = vmatprep.subr.mxu0 0.0
    %934 = vmatpush1.msra.mxu0 0.0
    %935 = vmatprep.subr.mxu0 0.0
    %936 = vmatpush1.msra.mxu0 0.0
    %937 = vmatprep.subr.mxu0 0.0
    %938 = vmatpush1.msra.mxu0 0.0
    %939 = vmatprep.subr.mxu0 0.0
    %940 = vmatpush1.msra.mxu0 0.0
    %941 = vmatprep.subr.mxu0 0.0
    %942 = vmatpush1.msra.mxu0 0.0
    %943 = vmatprep.subr.mxu0 0.0
    %944 = vmatpush1.msra.mxu0 0.0
    %945 = vmatprep.subr.mxu0 0.0
    %946 = vmatpush1.msra.mxu0 0.0
    %947 = vmatprep.subr.mxu0 0.0
    %948 = vmatpush1.msra.mxu0 0.0
    %949 = vmatprep.subr.mxu0 0.0
    %950 = vmatpush1.msra.mxu0 0.0
    %951 = vmatprep.subr.mxu0 0.0
    %952 = vmatpush1.msra.mxu0 0.0
    %953 = vmatprep.subr.mxu0 0.0
    %954 = vmatpush1.msra.mxu0 0.0
    %955 = vmatprep.subr.mxu0 0.0
    %956 = vmatpush1.msra.mxu0 0.0
    %957 = vmatprep.subr.mxu0 0.0
    %958 = vmatpush1.msra.mxu0 0.0
    %959 = vmatprep.subr.mxu0 0.0
    %960 = vmatpush1.msra.mxu0 0.0
    %961 = vmatprep.subr.mxu0 0.0
    %962 = vmatpush1.msra.mxu0 0.0
    %963 = vmatprep.subr.mxu0 0.0
    %964 = vmatpush1.msra.mxu0 0.0
    %965 = vmatprep.subr.mxu0 0.0
    %966 = vmatpush1.msra.mxu0 0.0
    %967 = vmatprep.subr.mxu0 0.0
    %968 = vmatpush1.msra.mxu0 0.0
    %969 = vmatprep.subr.mxu0 0.0
    %970 = vmatpush1.msra.mxu0 0.0
    %971 = vmatprep.subr.mxu0 0.0
    %972 = vmatpush1.msra.mxu0 0.0
    %973 = vmatprep.subr.mxu0 0.0
    %974 = vmatpush1.msra.mxu0 0.0
    %975 = vmatprep.subr.mxu0 0.0
    %976 = vmatpush1.msra.mxu0 0.0
    %977 = vmatprep.subr.mxu0 0.0
    %978 = vmatpush1.msra.mxu0 0.0
    %979 = vmatprep.subr.mxu0 0.0
    %980 = vmatpush1.msra.mxu0 0.0
    %981 = vmatprep.mubr.f32.mxu0 0.0
    %v982 = vand.u32 %v501, 4294901760
    %983 = vmatmul.mubr.f32.gmra.mrb[0].mxu0 %v982
    %v984 = vpop.f32.mrb[0].mxu0
    %v985 = vadd.f32 %v910, %v984
    %v986 = vpop.f32.mrb[0].mxu0
    %987 = vdwg.mxu0
    %v988 = vmax.f32 %v985, 0.0
    %v989 = vlaneseq
    %v990 = vshrl.u32 %v989, 7
    %v991 = vsub.s32 0, %v990
    %v992 = vrot.slane %v35, %v991
    %vm993 = vcmask 130048
    %v995 = vsel %vm993, %v988, 0
    %997 = vmatprep.subr.mxu0 0.0
    %v998 = vand.u32 %v33, 4294901760
    %999 = vmatpush1.msra.mxu0 %v998
    %1000 = vmatprep.subr.mxu0 0.0
    %v1001 = vand.u32 %v34, 4294901760
    %1002 = vmatpush1.msra.mxu0 %v1001
    %1003 = vmatprep.subr.mxu0 0.0
    %1004 = vmatpush1.msra.mxu0 0.0
    %1005 = vmatprep.subr.mxu0 0.0
    %1006 = vmatpush1.msra.mxu0 0.0
    %1007 = vmatprep.subr.mxu0 0.0
    %1008 = vmatpush1.msra.mxu0 0.0
    %1009 = vmatprep.subr.mxu0 0.0
    %1010 = vmatpush1.msra.mxu0 0.0
    %1011 = vmatprep.subr.mxu0 0.0
    %1012 = vmatpush1.msra.mxu0 0.0
    %1013 = vmatprep.subr.mxu0 0.0
    %1014 = vmatpush1.msra.mxu0 0.0
    %1015 = vmatprep.subr.mxu0 0.0
    %1016 = vmatpush1.msra.mxu0 0.0
    %1017 = vmatprep.subr.mxu0 0.0
    %1018 = vmatpush1.msra.mxu0 0.0
    %1019 = vmatprep.subr.mxu0 0.0
    %1020 = vmatpush1.msra.mxu0 0.0
    %1021 = vmatprep.subr.mxu0 0.0
    %1022 = vmatpush1.msra.mxu0 0.0
    %1023 = vmatprep.subr.mxu0 0.0
    %1024 = vmatpush1.msra.mxu0 0.0
    %1025 = vmatprep.subr.mxu0 0.0
    %1026 = vmatpush1.msra.mxu0 0.0
    %1027 = vmatprep.subr.mxu0 0.0
    %1028 = vmatpush1.msra.mxu0 0.0
    %1029 = vmatprep.subr.mxu0 0.0
    %1030 = vmatpush1.msra.mxu0 0.0
    %1031 = vmatprep.subr.mxu0 0.0
    %1032 = vmatpush1.msra.mxu0 0.0
    %1033 = vmatprep.subr.mxu0 0.0
    %1034 = vmatpush1.msra.mxu0 0.0
    %1035 = vmatprep.subr.mxu0 0.0
    %1036 = vmatpush1.msra.mxu0 0.0
    %1037 = vmatprep.subr.mxu0 0.0
    %1038 = vmatpush1.msra.mxu0 0.0
    %1039 = vmatprep.subr.mxu0 0.0
    %1040 = vmatpush1.msra.mxu0 0.0
    %1041 = vmatprep.subr.mxu0 0.0
    %1042 = vmatpush1.msra.mxu0 0.0
    %1043 = vmatprep.subr.mxu0 0.0
    %1044 = vmatpush1.msra.mxu0 0.0
    %1045 = vmatprep.subr.mxu0 0.0
    %1046 = vmatpush1.msra.mxu0 0.0
    %1047 = vmatprep.subr.mxu0 0.0
    %1048 = vmatpush1.msra.mxu0 0.0
    %1049 = vmatprep.subr.mxu0 0.0
    %1050 = vmatpush1.msra.mxu0 0.0
    %1051 = vmatprep.subr.mxu0 0.0
    %1052 = vmatpush1.msra.mxu0 0.0
    %1053 = vmatprep.subr.mxu0 0.0
    %1054 = vmatpush1.msra.mxu0 0.0
    %1055 = vmatprep.subr.mxu0 0.0
    %1056 = vmatpush1.msra.mxu0 0.0
    %1057 = vmatprep.subr.mxu0 0.0
    %1058 = vmatpush1.msra.mxu0 0.0
    %1059 = vmatprep.subr.mxu0 0.0
    %1060 = vmatpush1.msra.mxu0 0.0
    %1061 = vmatprep.subr.mxu0 0.0
    %1062 = vmatpush1.msra.mxu0 0.0
    %1063 = vmatprep.mubr.f32.mxu0 0.0
    %v1064 = vand.u32 %v995, 4294901760
    %v1065 = vsub.f32 %v995, %v1064
    %v1066 = vand.u32 %v1065, 4294901760
    %v1067 = vsub.f32 %v1065, %v1066
    %v1068 = vand.u32 %v1067, 4294901760
    %1069 = vmatmul.mubr.f32.gmra.mrb[0].mxu0 %v1068
    %v1070 = vpop.f32.mrb[0].mxu0
    %v1071 = vadd.f32 %v992, %v1070
    %v1072 = vpop.f32.mrb[0].mxu0
    %1073 = vdwg.mxu0
    %1074 = vmatprep.subr.mxu0 0.0
    %v1075 = vand.u32 %v33, 4294901760
    %v1076 = vsub.f32 %v33, %v1075
    %v1077 = vand.u32 %v1076, 4294901760
    %v1078 = vsub.f32 %v1076, %v1077
    %v1079 = vand.u32 %v1078, 4294901760
    %1080 = vmatpush1.msra.mxu0 %v1079
    %1081 = vmatprep.subr.mxu0 0.0
    %v1082 = vand.u32 %v34, 4294901760
    %v1083 = vsub.f32 %v34, %v1082
    %v1084 = vand.u32 %v1083, 4294901760
    %v1085 = vsub.f32 %v1083, %v1084
    %v1086 = vand.u32 %v1085, 4294901760
    %1087 = vmatpush1.msra.mxu0 %v1086
    %1088 = vmatprep.subr.mxu0 0.0
    %1089 = vmatpush1.msra.mxu0 0.0
    %1090 = vmatprep.subr.mxu0 0.0
    %1091 = vmatpush1.msra.mxu0 0.0
    %1092 = vmatprep.subr.mxu0 0.0
    %1093 = vmatpush1.msra.mxu0 0.0
    %1094 = vmatprep.subr.mxu0 0.0
    %1095 = vmatpush1.msra.mxu0 0.0
    %1096 = vmatprep.subr.mxu0 0.0
    %1097 = vmatpush1.msra.mxu0 0.0
    %1098 = vmatprep.subr.mxu0 0.0
    %1099 = vmatpush1.msra.mxu0 0.0
    %1100 = vmatprep.subr.mxu0 0.0
    %1101 = vmatpush1.msra.mxu0 0.0
    %1102 = vmatprep.subr.mxu0 0.0
    %1103 = vmatpush1.msra.mxu0 0.0
    %1104 = vmatprep.subr.mxu0 0.0
    %1105 = vmatpush1.msra.mxu0 0.0
    %1106 = vmatprep.subr.mxu0 0.0
    %1107 = vmatpush1.msra.mxu0 0.0
    %1108 = vmatprep.subr.mxu0 0.0
    %1109 = vmatpush1.msra.mxu0 0.0
    %1110 = vmatprep.subr.mxu0 0.0
    %1111 = vmatpush1.msra.mxu0 0.0
    %1112 = vmatprep.subr.mxu0 0.0
    %1113 = vmatpush1.msra.mxu0 0.0
    %1114 = vmatprep.subr.mxu0 0.0
    %1115 = vmatpush1.msra.mxu0 0.0
    %1116 = vmatprep.subr.mxu0 0.0
    %1117 = vmatpush1.msra.mxu0 0.0
    %1118 = vmatprep.subr.mxu0 0.0
    %1119 = vmatpush1.msra.mxu0 0.0
    %1120 = vmatprep.subr.mxu0 0.0
    %1121 = vmatpush1.msra.mxu0 0.0
    %1122 = vmatprep.subr.mxu0 0.0
    %1123 = vmatpush1.msra.mxu0 0.0
    %1124 = vmatprep.subr.mxu0 0.0
    %1125 = vmatpush1.msra.mxu0 0.0
    %1126 = vmatprep.subr.mxu0 0.0
    %1127 = vmatpush1.msra.mxu0 0.0
    %1128 = vmatprep.subr.mxu0 0.0
    %1129 = vmatpush1.msra.mxu0 0.0
    %1130 = vmatprep.subr.mxu0 0.0
    %1131 = vmatpush1.msra.mxu0 0.0
    %1132 = vmatprep.subr.mxu0 0.0
    %1133 = vmatpush1.msra.mxu0 0.0
    %1134 = vmatprep.subr.mxu0 0.0
    %1135 = vmatpush1.msra.mxu0 0.0
    %1136 = vmatprep.subr.mxu0 0.0
    %1137 = vmatpush1.msra.mxu0 0.0
    %1138 = vmatprep.subr.mxu0 0.0
    %1139 = vmatpush1.msra.mxu0 0.0
    %1140 = vmatprep.subr.mxu0 0.0
    %1141 = vmatpush1.msra.mxu0 0.0
    %1142 = vmatprep.subr.mxu0 0.0
    %1143 = vmatpush1.msra.mxu0 0.0
    %1144 = vmatprep.subr.mxu0 0.0
    %1145 = vmatpush1.msra.mxu0 0.0
    %1146 = vmatprep.subr.mxu0 0.0
    %1147 = vmatpush1.msra.mxu0 0.0
    %1148 = vmatprep.mubr.f32.mxu0 0.0
    %v1149 = vand.u32 %v995, 4294901760
    %1150 = vmatmul.mubr.f32.gmra.mrb[0].mxu0 %v1149
    %v1151 = vpop.f32.mrb[0].mxu0
    %v1152 = vadd.f32 %v1071, %v1151
    %v1153 = vpop.f32.mrb[0].mxu0
    %1154 = vdwg.mxu0
    %1155 = vmatprep.subr.mxu0 0.0
    %v1156 = vand.u32 %v33, 4294901760
    %v1157 = vsub.f32 %v33, %v1156
    %1158 = vmatpush1.msra.mxu0 %v1157
    %1159 = vmatprep.subr.mxu0 0.0
    %v1160 = vand.u32 %v34, 4294901760
    %v1161 = vsub.f32 %v34, %v1160
    %1162 = vmatpush1.msra.mxu0 %v1161
    %1163 = vmatprep.subr.mxu0 0.0
    %1164 = vmatpush1.msra.mxu0 0.0
    %1165 = vmatprep.subr.mxu0 0.0
    %1166 = vmatpush1.msra.mxu0 0.0
    %1167 = vmatprep.subr.mxu0 0.0
    %1168 = vmatpush1.msra.mxu0 0.0
    %1169 = vmatprep.subr.mxu0 0.0
    %1170 = vmatpush1.msra.mxu0 0.0
    %1171 = vmatprep.subr.mxu0 0.0
    %1172 = vmatpush1.msra.mxu0 0.0
    %1173 = vmatprep.subr.mxu0 0.0
    %1174 = vmatpush1.msra.mxu0 0.0
    %1175 = vmatprep.subr.mxu0 0.0
    %1176 = vmatpush1.msra.mxu0 0.0
    %1177 = vmatprep.subr.mxu0 0.0
    %1178 = vmatpush1.msra.mxu0 0.0
    %1179 = vmatprep.subr.mxu0 0.0
    %1180 = vmatpush1.msra.mxu0 0.0
    %1181 = vmatprep.subr.mxu0 0.0
    %1182 = vmatpush1.msra.mxu0 0.0
    %1183 = vmatprep.subr.mxu0 0.0
    %1184 = vmatpush1.msra.mxu0 0.0
    %1185 = vmatprep.subr.mxu0 0.0
    %1186 = vmatpush1.msra.mxu0 0.0
    %1187 = vmatprep.subr.mxu0 0.0
    %1188 = vmatpush1.msra.mxu0 0.0
    %1189 = vmatprep.subr.mxu0 0.0
    %1190 = vmatpush1.msra.mxu0 0.0
    %1191 = vmatprep.subr.mxu0 0.0
    %1192 = vmatpush1.msra.mxu0 0.0
    %1193 = vmatprep.subr.mxu0 0.0
    %1194 = vmatpush1.msra.mxu0 0.0
    %1195 = vmatprep.subr.mxu0 0.0
    %1196 = vmatpush1.msra.mxu0 0.0
    %1197 = vmatprep.subr.mxu0 0.0
    %1198 = vmatpush1.msra.mxu0 0.0
    %1199 = vmatprep.subr.mxu0 0.0
    %1200 = vmatpush1.msra.mxu0 0.0
    %1201 = vmatprep.subr.mxu0 0.0
    %1202 = vmatpush1.msra.mxu0 0.0
    %1203 = vmatprep.subr.mxu0 0.0
    %1204 = vmatpush1.msra.mxu0 0.0
    %1205 = vmatprep.subr.mxu0 0.0
    %1206 = vmatpush1.msra.mxu0 0.0
    %1207 = vmatprep.subr.mxu0 0.0
    %1208 = vmatpush1.msra.mxu0 0.0
    %1209 = vmatprep.subr.mxu0 0.0
    %1210 = vmatpush1.msra.mxu0 0.0
    %1211 = vmatprep.subr.mxu0 0.0
    %1212 = vmatpush1.msra.mxu0 0.0
    %1213 = vmatprep.subr.mxu0 0.0
    %1214 = vmatpush1.msra.mxu0 0.0
    %1215 = vmatprep.subr.mxu0 0.0
    %1216 = vmatpush1.msra.mxu0 0.0
    %1217 = vmatprep.subr.mxu0 0.0
    %1218 = vmatpush1.msra.mxu0 0.0
    %1219 = vmatprep.subr.mxu0 0.0
    %1220 = vmatpush1.msra.mxu0 0.0
    %1221 = vmatprep.subr.mxu0 0.0
    %1222 = vmatpush1.msra.mxu0 0.0
    %1223 = vmatprep.mubr.f32.mxu0 0.0
    %v1224 = vand.u32 %v995, 4294901760
    %v1225 = vsub.f32 %v995, %v1224
    %1226 = vmatmul.mubr.f32.gmra.mrb[0].mxu0 %v1225
    %v1227 = vpop.f32.mrb[0].mxu0
    %v1228 = vadd.f32 %v1152, %v1227
    %v1229 = vpop.f32.mrb[0].mxu0
    %1230 = vdwg.mxu0
    %1231 = vmatprep.subr.mxu0 0.0
    %v1232 = vand.u32 %v33, 4294901760
    %1233 = vmatpush1.msra.mxu0 %v1232
    %1234 = vmatprep.subr.mxu0 0.0
    %v1235 = vand.u32 %v34, 4294901760
    %1236 = vmatpush1.msra.mxu0 %v1235
    %1237 = vmatprep.subr.mxu0 0.0
    %1238 = vmatpush1.msra.mxu0 0.0
    %1239 = vmatprep.subr.mxu0 0.0
    %1240 = vmatpush1.msra.mxu0 0.0
    %1241 = vmatprep.subr.mxu0 0.0
    %1242 = vmatpush1.msra.mxu0 0.0
    %1243 = vmatprep.subr.mxu0 0.0
    %1244 = vmatpush1.msra.mxu0 0.0
    %1245 = vmatprep.subr.mxu0 0.0
    %1246 = vmatpush1.msra.mxu0 0.0
    %1247 = vmatprep.subr.mxu0 0.0
    %1248 = vmatpush1.msra.mxu0 0.0
    %1249 = vmatprep.subr.mxu0 0.0
    %1250 = vmatpush1.msra.mxu0 0.0
    %1251 = vmatprep.subr.mxu0 0.0
    %1252 = vmatpush1.msra.mxu0 0.0
    %1253 = vmatprep.subr.mxu0 0.0
    %1254 = vmatpush1.msra.mxu0 0.0
    %1255 = vmatprep.subr.mxu0 0.0
    %1256 = vmatpush1.msra.mxu0 0.0
    %1257 = vmatprep.subr.mxu0 0.0
    %1258 = vmatpush1.msra.mxu0 0.0
    %1259 = vmatprep.subr.mxu0 0.0
    %1260 = vmatpush1.msra.mxu0 0.0
    %1261 = vmatprep.subr.mxu0 0.0
    %1262 = vmatpush1.msra.mxu0 0.0
    %1263 = vmatprep.subr.mxu0 0.0
    %1264 = vmatpush1.msra.mxu0 0.0
    %1265 = vmatprep.subr.mxu0 0.0
    %1266 = vmatpush1.msra.mxu0 0.0
    %1267 = vmatprep.subr.mxu0 0.0
    %1268 = vmatpush1.msra.mxu0 0.0
    %1269 = vmatprep.subr.mxu0 0.0
    %1270 = vmatpush1.msra.mxu0 0.0
    %1271 = vmatprep.subr.mxu0 0.0
    %1272 = vmatpush1.msra.mxu0 0.0
    %1273 = vmatprep.subr.mxu0 0.0
    %1274 = vmatpush1.msra.mxu0 0.0
    %1275 = vmatprep.subr.mxu0 0.0
    %1276 = vmatpush1.msra.mxu0 0.0
    %1277 = vmatprep.subr.mxu0 0.0
    %1278 = vmatpush1.msra.mxu0 0.0
    %1279 = vmatprep.subr.mxu0 0.0
    %1280 = vmatpush1.msra.mxu0 0.0
    %1281 = vmatprep.subr.mxu0 0.0
    %1282 = vmatpush1.msra.mxu0 0.0
    %1283 = vmatprep.subr.mxu0 0.0
    %1284 = vmatpush1.msra.mxu0 0.0
    %1285 = vmatprep.subr.mxu0 0.0
    %1286 = vmatpush1.msra.mxu0 0.0
    %1287 = vmatprep.subr.mxu0 0.0
    %1288 = vmatpush1.msra.mxu0 0.0
    %1289 = vmatprep.subr.mxu0 0.0
    %1290 = vmatpush1.msra.mxu0 0.0
    %1291 = vmatprep.subr.mxu0 0.0
    %1292 = vmatpush1.msra.mxu0 0.0
    %1293 = vmatprep.subr.mxu0 0.0
    %1294 = vmatpush1.msra.mxu0 0.0
    %1295 = vmatprep.subr.mxu0 0.0
    %1296 = vmatpush1.msra.mxu0 0.0
    %1297 = vmatprep.mubr.f32.mxu0 0.0
    %v1298 = vand.u32 %v995, 4294901760
    %v1299 = vsub.f32 %v995, %v1298
    %v1300 = vand.u32 %v1299, 4294901760
    %1301 = vmatmul.mubr.f32.gmra.mrb[0].mxu0 %v1300
    %v1302 = vpop.f32.mrb[0].mxu0
    %v1303 = vadd.f32 %v1228, %v1302
    %v1304 = vpop.f32.mrb[0].mxu0
    %1305 = vdwg.mxu0
    %1306 = vmatprep.subr.mxu0 0.0
    %v1307 = vand.u32 %v33, 4294901760
    %v1308 = vsub.f32 %v33, %v1307
    %v1309 = vand.u32 %v1308, 4294901760
    %1310 = vmatpush1.msra.mxu0 %v1309
    %1311 = vmatprep.subr.mxu0 0.0
    %v1312 = vand.u32 %v34, 4294901760
    %v1313 = vsub.f32 %v34, %v1312
    %v1314 = vand.u32 %v1313, 4294901760
    %1315 = vmatpush1.msra.mxu0 %v1314
    %1316 = vmatprep.subr.mxu0 0.0
    %1317 = vmatpush1.msra.mxu0 0.0
    %1318 = vmatprep.subr.mxu0 0.0
    %1319 = vmatpush1.msra.mxu0 0.0
    %1320 = vmatprep.subr.mxu0 0.0
    %1321 = vmatpush1.msra.mxu0 0.0
    %1322 = vmatprep.subr.mxu0 0.0
    %1323 = vmatpush1.msra.mxu0 0.0
    %1324 = vmatprep.subr.mxu0 0.0
    %1325 = vmatpush1.msra.mxu0 0.0
    %1326 = vmatprep.subr.mxu0 0.0
    %1327 = vmatpush1.msra.mxu0 0.0
    %1328 = vmatprep.subr.mxu0 0.0
    %1329 = vmatpush1.msra.mxu0 0.0
    %1330 = vmatprep.subr.mxu0 0.0
    %1331 = vmatpush1.msra.mxu0 0.0
    %1332 = vmatprep.subr.mxu0 0.0
    %1333 = vmatpush1.msra.mxu0 0.0
    %1334 = vmatprep.subr.mxu0 0.0
    %1335 = vmatpush1.msra.mxu0 0.0
    %1336 = vmatprep.subr.mxu0 0.0
    %1337 = vmatpush1.msra.mxu0 0.0
    %1338 = vmatprep.subr.mxu0 0.0
    %1339 = vmatpush1.msra.mxu0 0.0
    %1340 = vmatprep.subr.mxu0 0.0
    %1341 = vmatpush1.msra.mxu0 0.0
    %1342 = vmatprep.subr.mxu0 0.0
    %1343 = vmatpush1.msra.mxu0 0.0
    %1344 = vmatprep.subr.mxu0 0.0
    %1345 = vmatpush1.msra.mxu0 0.0
    %1346 = vmatprep.subr.mxu0 0.0
    %1347 = vmatpush1.msra.mxu0 0.0
    %1348 = vmatprep.subr.mxu0 0.0
    %1349 = vmatpush1.msra.mxu0 0.0
    %1350 = vmatprep.subr.mxu0 0.0
    %1351 = vmatpush1.msra.mxu0 0.0
    %1352 = vmatprep.subr.mxu0 0.0
    %1353 = vmatpush1.msra.mxu0 0.0
    %1354 = vmatprep.subr.mxu0 0.0
    %1355 = vmatpush1.msra.mxu0 0.0
    %1356 = vmatprep.subr.mxu0 0.0
    %1357 = vmatpush1.msra.mxu0 0.0
    %1358 = vmatprep.subr.mxu0 0.0
    %1359 = vmatpush1.msra.mxu0 0.0
    %1360 = vmatprep.subr.mxu0 0.0
    %1361 = vmatpush1.msra.mxu0 0.0
    %1362 = vmatprep.subr.mxu0 0.0
    %1363 = vmatpush1.msra.mxu0 0.0
    %1364 = vmatprep.subr.mxu0 0.0
    %1365 = vmatpush1.msra.mxu0 0.0
    %1366 = vmatprep.subr.mxu0 0.0
    %1367 = vmatpush1.msra.mxu0 0.0
    %1368 = vmatprep.subr.mxu0 0.0
    %1369 = vmatpush1.msra.mxu0 0.0
    %1370 = vmatprep.subr.mxu0 0.0
    %1371 = vmatpush1.msra.mxu0 0.0
    %1372 = vmatprep.subr.mxu0 0.0
    %1373 = vmatpush1.msra.mxu0 0.0
    %1374 = vmatprep.subr.mxu0 0.0
    %1375 = vmatpush1.msra.mxu0 0.0
    %1376 = vmatprep.mubr.f32.mxu0 0.0
    %v1377 = vand.u32 %v995, 4294901760
    %1378 = vmatmul.mubr.f32.gmra.mrb[0].mxu0 %v1377
    %v1379 = vpop.f32.mrb[0].mxu0
    %v1380 = vadd.f32 %v1303, %v1379
    %v1381 = vpop.f32.mrb[0].mxu0
    %1382 = vdwg.mxu0
    %1383 = vmatprep.subr.mxu0 0.0
    %v1384 = vand.u32 %v33, 4294901760
    %1385 = vmatpush1.msra.mxu0 %v1384
    %1386 = vmatprep.subr.mxu0 0.0
    %v1387 = vand.u32 %v34, 4294901760
    %1388 = vmatpush1.msra.mxu0 %v1387
    %1389 = vmatprep.subr.mxu0 0.0
    %1390 = vmatpush1.msra.mxu0 0.0
    %1391 = vmatprep.subr.mxu0 0.0
    %1392 = vmatpush1.msra.mxu0 0.0
    %1393 = vmatprep.subr.mxu0 0.0
    %1394 = vmatpush1.msra.mxu0 0.0
    %1395 = vmatprep.subr.mxu0 0.0
    %1396 = vmatpush1.msra.mxu0 0.0
    %1397 = vmatprep.subr.mxu0 0.0
    %1398 = vmatpush1.msra.mxu0 0.0
    %1399 = vmatprep.subr.mxu0 0.0
    %1400 = vmatpush1.msra.mxu0 0.0
    %1401 = vmatprep.subr.mxu0 0.0
    %1402 = vmatpush1.msra.mxu0 0.0
    %1403 = vmatprep.subr.mxu0 0.0
    %1404 = vmatpush1.msra.mxu0 0.0
    %1405 = vmatprep.subr.mxu0 0.0
    %1406 = vmatpush1.msra.mxu0 0.0
    %1407 = vmatprep.subr.mxu0 0.0
    %1408 = vmatpush1.msra.mxu0 0.0
    %1409 = vmatprep.subr.mxu0 0.0
    %1410 = vmatpush1.msra.mxu0 0.0
    %1411 = vmatprep.subr.mxu0 0.0
    %1412 = vmatpush1.msra.mxu0 0.0
    %1413 = vmatprep.subr.mxu0 0.0
    %1414 = vmatpush1.msra.mxu0 0.0
    %1415 = vmatprep.subr.mxu0 0.0
    %1416 = vmatpush1.msra.mxu0 0.0
    %1417 = vmatprep.subr.mxu0 0.0
    %1418 = vmatpush1.msra.mxu0 0.0
    %1419 = vmatprep.subr.mxu0 0.0
    %1420 = vmatpush1.msra.mxu0 0.0
    %1421 = vmatprep.subr.mxu0 0.0
    %1422 = vmatpush1.msra.mxu0 0.0
    %1423 = vmatprep.subr.mxu0 0.0
    %1424 = vmatpush1.msra.mxu0 0.0
    %1425 = vmatprep.subr.mxu0 0.0
    %1426 = vmatpush1.msra.mxu0 0.0
    %1427 = vmatprep.subr.mxu0 0.0
    %1428 = vmatpush1.msra.mxu0 0.0
    %1429 = vmatprep.subr.mxu0 0.0
    %1430 = vmatpush1.msra.mxu0 0.0
    %1431 = vmatprep.subr.mxu0 0.0
    %1432 = vmatpush1.msra.mxu0 0.0
    %1433 = vmatprep.subr.mxu0 0.0
    %1434 = vmatpush1.msra.mxu0 0.0
    %1435 = vmatprep.subr.mxu0 0.0
    %1436 = vmatpush1.msra.mxu0 0.0
    %1437 = vmatprep.subr.mxu0 0.0
    %1438 = vmatpush1.msra.mxu0 0.0
    %1439 = vmatprep.subr.mxu0 0.0
    %1440 = vmatpush1.msra.mxu0 0.0
    %1441 = vmatprep.subr.mxu0 0.0
    %1442 = vmatpush1.msra.mxu0 0.0
    %1443 = vmatprep.subr.mxu0 0.0
    %1444 = vmatpush1.msra.mxu0 0.0
    %1445 = vmatprep.subr.mxu0 0.0
    %1446 = vmatpush1.msra.mxu0 0.0
    %1447 = vmatprep.subr.mxu0 0.0
    %1448 = vmatpush1.msra.mxu0 0.0
    %1449 = vmatprep.mubr.f32.mxu0 0.0
    %v1450 = vand.u32 %v995, 4294901760
    %1451 = vmatmul.mubr.f32.gmra.mrb[0].mxu0 %v1450
    %v1452 = vpop.f32.mrb[0].mxu0
    %v1453 = vadd.f32 %v1380, %v1452
    %v1454 = vpop.f32.mrb[0].mxu0
    %1455 = vdwg.mxu0
    %v1456 = vmul.f32 %v1453, 0.5
    %v1457 = vmul.f32 %v1456, 1.442695
    %v1458 = vpow.pop %v1457
    %v1459 = vadd.f32 %v1458, 1e-05
    %1460 = vrot.lane.b32.xlu0 %v25, 126
    %v1461 = vpop.permute.xlu0 %1460
    %v1463 = vmul.f32 %v1459, %v1461
    %1465 = vrot.lane.b32.xlu0 %v1463, 127
    %v1466 = vpop.permute.xlu0 %1465
    %v1468 = vadd.f32 %v1453, %v1466
    %v1469 = vlaneseq
    %v1470 = vand.u32 %v1469, 127
    %vm1471 = vcmp.eq.s32.totalorder %v1470, 0
    %v1472 = vsel %vm1471, 1, 0
    %vm1473 = vcmp.eq.s32.totalorder %v1472, 1
    %1475 = vset.pattern.permute.xlu0 1
    %1476 = vperm.xlu0 %1475, %v1468
    %v1477 = vpop.permute.xlu0 %1476
    %v1479 = vsel %vm1473, %v1477, 0.0
    %v1480 = vadd.f32 %v1453, %v1479
    %1481 = vst [vmem:[%s2] sm:$0xff] %v1480
    // Predicated region
    $region14: #{vi_base_forward.1} parent=1 // pred_check
      _
    $region15: #{vi_base_forward.1} parent=1 // pred_check_branch
      %1483 = sbr.rel (0) target = $region17
    $region16: #{vi_base_forward.1} parent=1 // pred_region
      _
    $region17: #{vi_base_forward.1} parent=1 // pred_fallthru
      _
    // Predicated region
    $region18: #{vi_base_forward.1} parent=1 // pred_check
      _
    $region19: #{vi_base_forward.1} parent=1 // pred_check_branch
      %1485 = sbr.rel (0) target = $region21
    $region20: #{vi_base_forward.1} parent=1 // pred_region
      _
    $region21: #{vi_base_forward.1} parent=1 // pred_fallthru
      _
    %1486 = vsyncpa [#allocation3], 1

</llo_original>
